<compile_context>
chip_gen: v7x
topology: tpu7x:2x2x1
jax: 0.10.0
libtpu: 0.0.40
codegen_flags: <defaults>
</compile_context>

<pallas_src>
import functools

import jax
import jax.numpy as jnp
from jax.experimental import pallas as pl
from jax.experimental.pallas import tpu as pltpu


# Padded node count up to which the fused single-call path is used
# (adjacency bf16 <= 8 MiB; x2 buffers + activations stays well inside v7x 64 MiB VMEM).
FUSED_MAX_NODES = 2048


# ----------------------------------------------------------------------------------
# Kernels
# ----------------------------------------------------------------------------------
def gnn_fused_kernel(adj_ref, x_ref, pool_ref,
                     w1_ref, b1_ref, w2_ref, b2_ref, w3_ref, b3_ref,
                     wf1_ref, bf1_ref, wf2_ref, bf2_ref,
                     out_ref):
    """Whole forward pass with the normalized adjacency VMEM-resident (single grid step)."""
    adj = adj_ref[...]                                   # [Np, Np] bf16, read once

    def gcn(h_bf16, w_ref, b_ref):
        # aggregate-first: (A @ H) @ W + b  ==  A @ (H @ W) + b
        agg = jnp.dot(adj, h_bf16, preferred_element_type=jnp.float32)
        h = jnp.dot(agg.astype(jnp.bfloat16), w_ref[...],
                    preferred_element_type=jnp.float32) + b_ref[...]
        return jnp.maximum(h, 0.0).astype(jnp.bfloat16)  # ReLU; dropout = identity (eval)

    h = gcn(x_ref[...], w1_ref, b1_ref)                  # GCNConv1 + ReLU
    h = gcn(h, w2_ref, b2_ref)                           # GCNConv2 + ReLU
    h = gcn(h, w3_ref, b3_ref)                           # GCNConv3 + ReLU

    # global_mean_pool as dense [G,N] matmul, then fc1/ReLU + fc2
    p = jnp.dot(pool_ref[...], h, preferred_element_type=jnp.float32)
    p = jnp.dot(p.astype(jnp.bfloat16), wf1_ref[...],
                preferred_element_type=jnp.float32) + bf1_ref[...]
    p = jnp.maximum(p, 0.0).astype(jnp.bfloat16)
    o = jnp.dot(p, wf2_ref[...], preferred_element_type=jnp.float32) + bf2_ref[...]
    out_ref[...] = o.astype(out_ref.dtype)


def gcn_layer_tiled_kernel(adj_ref, x_ref, w_ref, b_ref, out_ref, acc_ref, *, k_tile):
    """One GCN layer row-tile with asymmetric adjacency block and VMEM-resident X.

    grid = (n_pad // row_tile, n_pad // k_tile); contraction axis last ("arbitrary").
    adj_ref: [row_tile, k_tile] bf16 block, x_ref: full [n_pad, f_in] bf16 (resident),
    acc_ref: [row_tile, f_in] f32 accumulator.
    """
    k = pl.program_id(1)

    @pl.when(k == 0)
    def _():
        acc_ref[...] = jnp.zeros_like(acc_ref)

    start = pl.multiple_of(k * k_tile, k_tile)
    x_chunk = x_ref[pl.ds(start, k_tile), :]             # slice resident X; no re-DMA
    acc_ref[...] += jnp.dot(adj_ref[...], x_chunk,
                            preferred_element_type=jnp.float32)

    @pl.when(k == pl.num_programs(1) - 1)
    def _():
        agg = acc_ref[...].astype(jnp.bfloat16)          # aggregated neighbours (A@X)
        h = jnp.dot(agg, w_ref[...], preferred_element_type=jnp.float32) + b_ref[...]
        out_ref[...] = jnp.maximum(h, 0.0).astype(out_ref.dtype)
        # dropout(p=0.2): identity in eval mode


def pool_fc_kernel(pool_ref, h_ref, wf1_ref, bf1_ref, wf2_ref, bf2_ref, out_ref):
    """global_mean_pool + fc1/ReLU + fc2 in a single grid step (operands are small)."""
    p = jnp.dot(pool_ref[...], h_ref[...], preferred_element_type=jnp.float32)
    p = jnp.dot(p.astype(jnp.bfloat16), wf1_ref[...],
                preferred_element_type=jnp.float32) + bf1_ref[...]
    p = jnp.maximum(p, 0.0).astype(jnp.bfloat16)
    o = jnp.dot(p, wf2_ref[...], preferred_element_type=jnp.float32) + bf2_ref[...]
    out_ref[...] = o.astype(out_ref.dtype)


# ----------------------------------------------------------------------------------
# Helpers
# ----------------------------------------------------------------------------------
def _round_up(x, m):
    return (x + m - 1) // m * m


def _pad2d(a, rows, cols, dtype):
    r, c = a.shape
    out = jnp.zeros((rows, cols), dtype)
    return out.at[:r, :c].set(a.astype(dtype))


def _vmem_limit(resident_bytes):
    """2x (double buffering) + headroom, clamped to [32 MiB, 64 MiB] (v7x physical)."""
    return int(min(max(2 * resident_bytes + (4 << 20), 32 << 20), 64 << 20))


def _pick_k_tile(n_pad, row_tile, max_k=2048):
    """Largest contraction chunk <= max_k that divides n_pad (n_pad multiple of row_tile)."""
    if n_pad <= max_k:
        return n_pad
    best = row_tile
    t = row_tile
    while t <= max_k:
        if n_pad % t == 0:
            best = t
        t += row_tile
    return best


# ----------------------------------------------------------------------------------
# Pallas-call wrappers
# ----------------------------------------------------------------------------------
def gnn_fused(adj_p, x_p, pool_p, w1, b1, w2, b2, w3, b3, wf1, bf1, wf2, bf2):
    n_pad = adj_p.shape[0]
    f_in = x_p.shape[1]
    h_pad = w1.shape[1]
    g_pad = pool_p.shape[0]
    o_pad = wf2.shape[1]

    flops = (2 * n_pad * n_pad * f_in + 2 * n_pad * f_in * h_pad
             + 2 * (2 * n_pad * n_pad * h_pad + 2 * n_pad * h_pad * h_pad)
             + 2 * g_pad * n_pad * h_pad + 2 * g_pad * h_pad * h_pad
             + 2 * g_pad * h_pad * o_pad)
    in_bytes = int((adj_p.size + x_p.size + pool_p.size + w1.size + w2.size + w3.size
                    + wf1.size + wf2.size) * 2
                   + (b1.size + b2.size + b3.size + bf1.size + bf2.size) * 4)
    out_bytes = g_pad * o_pad * 4
    # live f32 intermediates: (A@H) aggregate + H
    live_bytes = n_pad * h_pad * 4 + n_pad * h_pad * 2

    def full(shape):
        return pl.BlockSpec(shape, lambda i: (0, 0))

    return pl.pallas_call(
        gnn_fused_kernel,
        out_shape=jax.ShapeDtypeStruct((g_pad, o_pad), jnp.float32),
        grid_spec=pltpu.PrefetchScalarGridSpec(
            num_scalar_prefetch=0,
            grid=(1,),
            in_specs=[
                full(adj_p.shape), full(x_p.shape), full(pool_p.shape),
                full(w1.shape), full(b1.shape),
                full(w2.shape), full(b2.shape),
                full(w3.shape), full(b3.shape),
                full(wf1.shape), full(bf1.shape),
                full(wf2.shape), full(bf2.shape),
            ],
            out_specs=full((g_pad, o_pad)),
        ),
        compiler_params=pltpu.CompilerParams(
            dimension_semantics=("arbitrary",),
            vmem_limit_bytes=_vmem_limit(in_bytes + out_bytes + live_bytes)),
        cost_estimate=pl.CostEstimate(
            flops=flops, transcendentals=0, bytes_accessed=in_bytes + out_bytes),
    )(adj_p, x_p, pool_p, w1, b1, w2, b2, w3, b3, wf1, bf1, wf2, bf2)


def gcn_layer_tiled(adj_p, x_p, w_p, b_p, *, row_tile, k_tile):
    """Fallback per-layer kernel for graphs too large for the fused path."""
    n_pad = adj_p.shape[0]
    f_in = x_p.shape[1]
    f_out = w_p.shape[1]
    grid = (n_pad // row_tile, n_pad // k_tile)

    flops = 2 * n_pad * n_pad * f_in + 2 * n_pad * f_in * f_out
    bytes_accessed = int(2 * (n_pad * n_pad + n_pad * f_in + f_in * f_out + n_pad * f_out)
                         + 4 * f_out)
    block_bytes = (row_tile * k_tile * 2          # adjacency block
                   + n_pad * f_in * 2             # resident X
                   + f_in * f_out * 2             # resident W
                   + row_tile * f_out * 2         # output block
                   + row_tile * f_in * 4)         # f32 accumulator

    kernel = functools.partial(gcn_layer_tiled_kernel, k_tile=k_tile)
    return pl.pallas_call(
        kernel,
        out_shape=jax.ShapeDtypeStruct((n_pad, f_out), jnp.bfloat16),
        grid_spec=pltpu.PrefetchScalarGridSpec(
            num_scalar_prefetch=0,
            grid=grid,
            in_specs=[
                pl.BlockSpec((row_tile, k_tile), lambda i, k: (i, k)),  # adjacency block
                pl.BlockSpec((n_pad, f_in), lambda i, k: (0, 0)),       # X resident
                pl.BlockSpec((f_in, f_out), lambda i, k: (0, 0)),       # W resident
                pl.BlockSpec((1, f_out), lambda i, k: (0, 0)),          # bias resident
            ],
            out_specs=pl.BlockSpec((row_tile, f_out), lambda i, k: (i, 0)),
            scratch_shapes=[pltpu.VMEM((row_tile, f_in), jnp.float32)],
        ),
        compiler_params=pltpu.CompilerParams(
            dimension_semantics=("parallel", "arbitrary"),
            vmem_limit_bytes=_vmem_limit(block_bytes)),
        cost_estimate=pl.CostEstimate(
            flops=flops, transcendentals=0, bytes_accessed=bytes_accessed),
    )(adj_p, x_p, w_p, b_p)


def pool_fc_head(pool_p, h_p, wf1_p, bf1_p, wf2_p, bf2_p):
    g_pad, n_pad = pool_p.shape
    h_pad = h_p.shape[1]
    o_pad = wf2_p.shape[1]

    flops = 2 * (g_pad * n_pad * h_pad + g_pad * h_pad * h_pad + g_pad * h_pad * o_pad)
    in_bytes = int((pool_p.size + h_p.size + wf1_p.size + wf2_p.size) * 2
                   + (bf1_p.size + bf2_p.size) * 4)
    out_bytes = g_pad * o_pad * 4

    def full(shape):
        return pl.BlockSpec(shape, lambda i: (0, 0))

    return pl.pallas_call(
        pool_fc_kernel,
        out_shape=jax.ShapeDtypeStruct((g_pad, o_pad), jnp.float32),
        grid_spec=pltpu.PrefetchScalarGridSpec(
            num_scalar_prefetch=0,
            grid=(1,),
            in_specs=[full(pool_p.shape), full(h_p.shape),
                      full(wf1_p.shape), full(bf1_p.shape),
                      full(wf2_p.shape), full(bf2_p.shape)],
            out_specs=full((g_pad, o_pad)),
        ),
        compiler_params=pltpu.CompilerParams(
            dimension_semantics=("arbitrary",),
            vmem_limit_bytes=_vmem_limit(in_bytes + out_bytes)),
        cost_estimate=pl.CostEstimate(
            flops=flops, transcendentals=0, bytes_accessed=in_bytes + out_bytes),
    )(pool_p, h_p, wf1_p, bf1_p, wf2_p, bf2_p)


def gnn_forward(x, adj_norm, pool_mat, params, *, force_tiled=False):
    """Full forward pass: pad/cast operands, run Pallas kernels, unpad."""
    n, f_in = x.shape
    g = pool_mat.shape[0]
    hidden = params["w1"].shape[1]
    out_dim = params["wf2"].shape[1]

    use_fused = (not force_tiled) and n <= FUSED_MAX_NODES

    if use_fused:
        n_pad = _round_up(n, 128)
        row_tile = k_tile = n_pad                     # unused in fused path
    else:
        row_tile = 256 if n > 128 else 128
        n_pad = _round_up(n, row_tile)
        k_tile = _pick_k_tile(n_pad, row_tile)        # asymmetric adjacency block

    f_in_pad = _round_up(f_in, 128)
    h_pad = _round_up(hidden, 128)
    o_pad = _round_up(out_dim, 128)
    g_pad = _round_up(g, 16)                          # bf16 sublane packing

    # Lane-dense bf16 operands (zero padding is exact: padded adjacency/pool columns are
    # zero, so junk activations on padded node rows never propagate or reach the output).
    adj_p = _pad2d(adj_norm, n_pad, n_pad, jnp.bfloat16)
    x_p = _pad2d(x, n_pad, f_in_pad, jnp.bfloat16)
    pool_p = _pad2d(pool_mat, g_pad, n_pad, jnp.bfloat16)

    w1 = _pad2d(params["w1"], f_in_pad, h_pad, jnp.bfloat16)
    w2 = _pad2d(params["w2"], h_pad, h_pad, jnp.bfloat16)
    w3 = _pad2d(params["w3"], h_pad, h_pad, jnp.bfloat16)
    wf1 = _pad2d(params["wf1"], h_pad, h_pad, jnp.bfloat16)
    wf2 = _pad2d(params["wf2"], h_pad, o_pad, jnp.bfloat16)
    b1 = _pad2d(params["b1"], 1, h_pad, jnp.float32)
    b2 = _pad2d(params["b2"], 1, h_pad, jnp.float32)
    b3 = _pad2d(params["b3"], 1, h_pad, jnp.float32)
    bf1 = _pad2d(params["bf1"], 1, h_pad, jnp.float32)
    bf2 = _pad2d(params["bf2"], 1, o_pad, jnp.float32)

    if use_fused:
        out_p = gnn_fused(adj_p, x_p, pool_p, w1, b1, w2, b2, w3, b3, wf1, bf1, wf2, bf2)
    else:
        h = gcn_layer_tiled(adj_p, x_p, w1, b1, row_tile=row_tile, k_tile=k_tile)
        h = gcn_layer_tiled(adj_p, h, w2, b2, row_tile=row_tile, k_tile=k_tile)
        h = gcn_layer_tiled(adj_p, h, w3, b3, row_tile=row_tile, k_tile=k_tile)
        out_p = pool_fc_head(pool_p, h, wf1, bf1, wf2, bf2)

    return out_p[:g, :out_dim]


# ----------------------------------------------------------------------------------
# Glue (plain JAX): graph preprocessing, params, f32 reference
# ----------------------------------------------------------------------------------
def build_normalized_adjacency(edge_index, num_nodes):
    """Dense GCN-normalized adjacency: D^{-1/2} (A + I) D^{-1/2}."""
    src, dst = edge_index[0], edge_index[1]
    a = jnp.zeros((num_nodes, num_nodes), jnp.float32)
    a = a.at[dst, src].set(1.0)                      # message flows src -> dst
    a = a + jnp.eye(num_nodes, dtype=jnp.float32)    # self loops
    deg = a.sum(axis=1)
    dinv = jnp.where(deg > 0, 1.0 / jnp.sqrt(deg), 0.0)
    return dinv[:, None] * a * dinv[None, :]


def build_mean_pool(batch, num_graphs):
    """Dense [G, N] matrix so that P @ X == global_mean_pool(X, batch)."""
    onehot = (batch[None, :] == jnp.arange(num_graphs)[:, None]).astype(jnp.float32)
    counts = onehot.sum(axis=1, keepdims=True)
    return onehot / jnp.maximum(counts, 1.0)


def init_params(key, input_dim, hidden_dim, output_dim):
    ks = jax.random.split(key, 10)

    def lin(k, fan_in, fan_out):
        scale = 1.0 / jnp.sqrt(jnp.float32(fan_in))
        return jax.random.uniform(k, (fan_in, fan_out), jnp.float32, -scale, scale)

    return {
        "w1": lin(ks[0], input_dim, hidden_dim),
        "b1": jnp.zeros((1, hidden_dim), jnp.float32),
        "w2": lin(ks[1], hidden_dim, hidden_dim),
        "b2": jnp.zeros((1, hidden_dim), jnp.float32),
        "w3": lin(ks[2], hidden_dim, hidden_dim),
        "b3": jnp.zeros((1, hidden_dim), jnp.float32),
        "wf1": lin(ks[3], hidden_dim, hidden_dim),
        "bf1": jax.random.uniform(ks[4], (1, hidden_dim), jnp.float32,
                                  -1.0 / jnp.sqrt(hidden_dim), 1.0 / jnp.sqrt(hidden_dim)),
        "wf2": lin(ks[5], hidden_dim, output_dim),
        "bf2": jax.random.uniform(ks[6], (1, output_dim), jnp.float32,
                                  -1.0 / jnp.sqrt(hidden_dim), 1.0 / jnp.sqrt(hidden_dim)),
    }


def gnn_reference(x, adj, pool, params):
    """Pure-JAX f32 reference (PyG order A(XW)+b; equals (AX)W+b by associativity)."""
    h = jnp.maximum(adj @ (x @ params["w1"]) + params["b1"], 0.0)
    h = jnp.maximum(adj @ (h @ params["w2"]) + params["b2"], 0.0)
    h = jnp.maximum(adj @ (h @ params["w3"]) + params["b3"], 0.0)
    p = pool @ h
    p = jnp.maximum(p @ params["wf1"] + params["bf1"], 0.0)
    return p @ params["wf2"] + params["bf2"]


if __name__ == "__main__":
    key = jax.random.PRNGKey(0)
    k_x, k_p = jax.random.split(key)

    num_nodes = 16      # 2 graphs x 8 nodes
    num_graphs = 2
    input_dim = 8
    hidden_dim = 32
    output_dim = 4

    # Node features
    x = jax.random.normal(k_x, (num_nodes, input_dim), jnp.float32)

    # Deterministic edge_index: a ring inside each graph plus one chord per graph.
    edges = []
    for gidx in range(num_graphs):
        base = gidx * 8
        for i in range(8):
            edges.append((base + i, base + (i + 1) % 8))
            edges.append((base + (i + 1) % 8, base + i))
        edges.append((base + 0, base + 4))
        edges.append((base + 4, base + 0))
    edge_index = jnp.array(edges, dtype=jnp.int32).T          # [2, E]

    # Batch assignment: nodes 0..7 -> graph 0, nodes 8..15 -> graph 1
    batch = jnp.repeat(jnp.arange(num_graphs, dtype=jnp.int32), 8)

    adj_norm = build_normalized_adjacency(edge_index, num_nodes)
    pool_mat = build_mean_pool(batch, num_graphs)
    params = init_params(k_p, input_dim, hidden_dim, output_dim)

    ref = gnn_reference(x, adj_norm, pool_mat, params)

    # Fused single-call path (default for graphs that fit in VMEM).
    out_fused = jax.block_until_ready(gnn_forward(x, adj_norm, pool_mat, params))
    # Tiled fallback path (used for graphs beyond the fused VMEM ceiling).
    out_tiled = jax.block_until_ready(
        gnn_forward(x, adj_norm, pool_mat, params, force_tiled=True))

    err_fused = float(jnp.max(jnp.abs(out_fused - ref)))
    err_tiled = float(jnp.max(jnp.abs(out_tiled - ref)))

    assert out_fused.shape == (num_graphs, output_dim)
    assert out_tiled.shape == (num_graphs, output_dim)
    assert bool(jnp.all(jnp.isfinite(out_fused)))
    assert bool(jnp.all(jnp.isfinite(out_tiled)))
    assert err_fused < 0.1, f"fused bf16 kernel deviates from f32 reference: {err_fused}"
    assert err_tiled < 0.1, f"tiled bf16 kernel deviates from f32 reference: {err_tiled}"
    print("KERNEL_OK")
</pallas_src>

<mosaic_0001>
module attributes {stable_mosaic.version = 11 : i64} {
  func.func @gnn_fused_kernel(%arg0: i32, %arg1: memref<128x128xbf16, #tpu.memory_space<vmem>>, %arg2: memref<128x128xbf16, #tpu.memory_space<vmem>>, %arg3: memref<16x128xbf16, #tpu.memory_space<vmem>>, %arg4: memref<128x128xbf16, #tpu.memory_space<vmem>>, %arg5: memref<1x128xf32, #tpu.memory_space<vmem>>, %arg6: memref<128x128xbf16, #tpu.memory_space<vmem>>, %arg7: memref<1x128xf32, #tpu.memory_space<vmem>>, %arg8: memref<128x128xbf16, #tpu.memory_space<vmem>>, %arg9: memref<1x128xf32, #tpu.memory_space<vmem>>, %arg10: memref<128x128xbf16, #tpu.memory_space<vmem>>, %arg11: memref<1x128xf32, #tpu.memory_space<vmem>>, %arg12: memref<128x128xbf16, #tpu.memory_space<vmem>>, %arg13: memref<1x128xf32, #tpu.memory_space<vmem>>, %arg14: memref<16x128xf32, #tpu.memory_space<vmem>>) attributes {dimension_semantics = [#tpu.dimension_semantics<arbitrary>], iteration_bounds = array<i64: 1>, scalar_prefetch = 0 : i64, scratch_operands = 0 : i64, tpu.core_type = #tpu.core_type<tc>, window_params = [{pipeline_mode = #tpu.pipeline_mode<synchronous>, transform_indices = @transform_0, window_bounds = array<i64: 128, 128>}, {pipeline_mode = #tpu.pipeline_mode<synchronous>, transform_indices = @transform_1, window_bounds = array<i64: 128, 128>}, {pipeline_mode = #tpu.pipeline_mode<synchronous>, transform_indices = @transform_2, window_bounds = array<i64: 16, 128>}, {pipeline_mode = #tpu.pipeline_mode<synchronous>, transform_indices = @transform_3, window_bounds = array<i64: 128, 128>}, {pipeline_mode = #tpu.pipeline_mode<synchronous>, transform_indices = @transform_4, window_bounds = array<i64: 1, 128>}, {pipeline_mode = #tpu.pipeline_mode<synchronous>, transform_indices = @transform_5, window_bounds = array<i64: 128, 128>}, {pipeline_mode = #tpu.pipeline_mode<synchronous>, transform_indices = @transform_6, window_bounds = array<i64: 1, 128>}, {pipeline_mode = #tpu.pipeline_mode<synchronous>, transform_indices = @transform_7, window_bounds = array<i64: 128, 128>}, {pipeline_mode = #tpu.pipeline_mode<synchronous>, transform_indices = @transform_8, window_bounds = array<i64: 1, 128>}, {pipeline_mode = #tpu.pipeline_mode<synchronous>, transform_indices = @transform_9, window_bounds = array<i64: 128, 128>}, {pipeline_mode = #tpu.pipeline_mode<synchronous>, transform_indices = @transform_10, window_bounds = array<i64: 1, 128>}, {pipeline_mode = #tpu.pipeline_mode<synchronous>, transform_indices = @transform_11, window_bounds = array<i64: 128, 128>}, {pipeline_mode = #tpu.pipeline_mode<synchronous>, transform_indices = @transform_12, window_bounds = array<i64: 1, 128>}, {pipeline_mode = #tpu.pipeline_mode<synchronous>, transform_indices = @transform_13, window_bounds = array<i64: 16, 128>}]} {
    %c0 = arith.constant 0 : index
    %c0_0 = arith.constant 0 : index
    %0 = vector.load %arg1[%c0, %c0_0] : memref<128x128xbf16, #tpu.memory_space<vmem>>, vector<128x128xbf16>
    %c0_1 = arith.constant 0 : index
    %c0_2 = arith.constant 0 : index
    %1 = vector.load %arg2[%c0_1, %c0_2] : memref<128x128xbf16, #tpu.memory_space<vmem>>, vector<128x128xbf16>
    %cst = arith.constant dense<0.000000e+00> : vector<128x128xf32>
    %2 = tpu.matmul %0, %1, %cst {dimension_numbers = #tpu.dot_dimension_numbers<[1], [0], [0], [1], [0, 0, 1, 1], [], []>} : vector<128x128xbf16>, vector<128x128xbf16>, vector<128x128xf32> -> vector<128x128xf32>
    %3 = arith.truncf %2 : vector<128x128xf32> to vector<128x128xbf16>
    %c0_3 = arith.constant 0 : index
    %c0_4 = arith.constant 0 : index
    %4 = vector.load %arg4[%c0_3, %c0_4] : memref<128x128xbf16, #tpu.memory_space<vmem>>, vector<128x128xbf16>
    %cst_5 = arith.constant dense<0.000000e+00> : vector<128x128xf32>
    %5 = tpu.matmul %3, %4, %cst_5 {dimension_numbers = #tpu.dot_dimension_numbers<[1], [0], [0], [1], [0, 0, 1, 1], [], []>} : vector<128x128xbf16>, vector<128x128xbf16>, vector<128x128xf32> -> vector<128x128xf32>
    %c0_6 = arith.constant 0 : index
    %c0_7 = arith.constant 0 : index
    %6 = vector.load %arg5[%c0_6, %c0_7] : memref<1x128xf32, #tpu.memory_space<vmem>>, vector<1x128xf32>
    %7 = vector.broadcast %6 : vector<1x128xf32> to vector<128x128xf32>
    %8 = arith.addf %5, %7 : vector<128x128xf32>
    %cst_8 = arith.constant 0.000000e+00 : f32
    %9 = vector.broadcast %cst_8 : f32 to vector<128x128xf32>
    %10 = arith.maximumf %8, %9 : vector<128x128xf32>
    %11 = arith.truncf %10 : vector<128x128xf32> to vector<128x128xbf16>
    %cst_9 = arith.constant dense<0.000000e+00> : vector<128x128xf32>
    %12 = tpu.matmul %0, %11, %cst_9 {dimension_numbers = #tpu.dot_dimension_numbers<[1], [0], [0], [1], [0, 0, 1, 1], [], []>} : vector<128x128xbf16>, vector<128x128xbf16>, vector<128x128xf32> -> vector<128x128xf32>
    %13 = arith.truncf %12 : vector<128x128xf32> to vector<128x128xbf16>
    %c0_10 = arith.constant 0 : index
    %c0_11 = arith.constant 0 : index
    %14 = vector.load %arg6[%c0_10, %c0_11] : memref<128x128xbf16, #tpu.memory_space<vmem>>, vector<128x128xbf16>
    %cst_12 = arith.constant dense<0.000000e+00> : vector<128x128xf32>
    %15 = tpu.matmul %13, %14, %cst_12 {dimension_numbers = #tpu.dot_dimension_numbers<[1], [0], [0], [1], [0, 0, 1, 1], [], []>} : vector<128x128xbf16>, vector<128x128xbf16>, vector<128x128xf32> -> vector<128x128xf32>
    %c0_13 = arith.constant 0 : index
    %c0_14 = arith.constant 0 : index
    %16 = vector.load %arg7[%c0_13, %c0_14] : memref<1x128xf32, #tpu.memory_space<vmem>>, vector<1x128xf32>
    %17 = vector.broadcast %16 : vector<1x128xf32> to vector<128x128xf32>
    %18 = arith.addf %15, %17 : vector<128x128xf32>
    %cst_15 = arith.constant 0.000000e+00 : f32
    %19 = vector.broadcast %cst_15 : f32 to vector<128x128xf32>
    %20 = arith.maximumf %18, %19 : vector<128x128xf32>
    %21 = arith.truncf %20 : vector<128x128xf32> to vector<128x128xbf16>
    %cst_16 = arith.constant dense<0.000000e+00> : vector<128x128xf32>
    %22 = tpu.matmul %0, %21, %cst_16 {dimension_numbers = #tpu.dot_dimension_numbers<[1], [0], [0], [1], [0, 0, 1, 1], [], []>} : vector<128x128xbf16>, vector<128x128xbf16>, vector<128x128xf32> -> vector<128x128xf32>
    %23 = arith.truncf %22 : vector<128x128xf32> to vector<128x128xbf16>
    %c0_17 = arith.constant 0 : index
    %c0_18 = arith.constant 0 : index
    %24 = vector.load %arg8[%c0_17, %c0_18] : memref<128x128xbf16, #tpu.memory_space<vmem>>, vector<128x128xbf16>
    %cst_19 = arith.constant dense<0.000000e+00> : vector<128x128xf32>
    %25 = tpu.matmul %23, %24, %cst_19 {dimension_numbers = #tpu.dot_dimension_numbers<[1], [0], [0], [1], [0, 0, 1, 1], [], []>} : vector<128x128xbf16>, vector<128x128xbf16>, vector<128x128xf32> -> vector<128x128xf32>
    %c0_20 = arith.constant 0 : index
    %c0_21 = arith.constant 0 : index
    %26 = vector.load %arg9[%c0_20, %c0_21] : memref<1x128xf32, #tpu.memory_space<vmem>>, vector<1x128xf32>
    %27 = vector.broadcast %26 : vector<1x128xf32> to vector<128x128xf32>
    %28 = arith.addf %25, %27 : vector<128x128xf32>
    %cst_22 = arith.constant 0.000000e+00 : f32
    %29 = vector.broadcast %cst_22 : f32 to vector<128x128xf32>
    %30 = arith.maximumf %28, %29 : vector<128x128xf32>
    %31 = arith.truncf %30 : vector<128x128xf32> to vector<128x128xbf16>
    %c0_23 = arith.constant 0 : index
    %c0_24 = arith.constant 0 : index
    %32 = vector.load %arg3[%c0_23, %c0_24] : memref<16x128xbf16, #tpu.memory_space<vmem>>, vector<16x128xbf16>
    %cst_25 = arith.constant dense<0.000000e+00> : vector<16x128xf32>
    %33 = tpu.matmul %32, %31, %cst_25 {dimension_numbers = #tpu.dot_dimension_numbers<[1], [0], [0], [1], [0, 0, 1, 1], [], []>} : vector<16x128xbf16>, vector<128x128xbf16>, vector<16x128xf32> -> vector<16x128xf32>
    %34 = arith.truncf %33 : vector<16x128xf32> to vector<16x128xbf16>
    %c0_26 = arith.constant 0 : index
    %c0_27 = arith.constant 0 : index
    %35 = vector.load %arg10[%c0_26, %c0_27] : memref<128x128xbf16, #tpu.memory_space<vmem>>, vector<128x128xbf16>
    %cst_28 = arith.constant dense<0.000000e+00> : vector<16x128xf32>
    %36 = tpu.matmul %34, %35, %cst_28 {dimension_numbers = #tpu.dot_dimension_numbers<[1], [0], [0], [1], [0, 0, 1, 1], [], []>} : vector<16x128xbf16>, vector<128x128xbf16>, vector<16x128xf32> -> vector<16x128xf32>
    %c0_29 = arith.constant 0 : index
    %c0_30 = arith.constant 0 : index
    %37 = vector.load %arg11[%c0_29, %c0_30] : memref<1x128xf32, #tpu.memory_space<vmem>>, vector<1x128xf32>
    %38 = vector.broadcast %37 : vector<1x128xf32> to vector<16x128xf32>
    %39 = arith.addf %36, %38 : vector<16x128xf32>
    %cst_31 = arith.constant 0.000000e+00 : f32
    %40 = vector.broadcast %cst_31 : f32 to vector<16x128xf32>
    %41 = arith.maximumf %39, %40 : vector<16x128xf32>
    %42 = arith.truncf %41 : vector<16x128xf32> to vector<16x128xbf16>
    %c0_32 = arith.constant 0 : index
    %c0_33 = arith.constant 0 : index
    %43 = vector.load %arg12[%c0_32, %c0_33] : memref<128x128xbf16, #tpu.memory_space<vmem>>, vector<128x128xbf16>
    %cst_34 = arith.constant dense<0.000000e+00> : vector<16x128xf32>
    %44 = tpu.matmul %42, %43, %cst_34 {dimension_numbers = #tpu.dot_dimension_numbers<[1], [0], [0], [1], [0, 0, 1, 1], [], []>} : vector<16x128xbf16>, vector<128x128xbf16>, vector<16x128xf32> -> vector<16x128xf32>
    %c0_35 = arith.constant 0 : index
    %c0_36 = arith.constant 0 : index
    %45 = vector.load %arg13[%c0_35, %c0_36] : memref<1x128xf32, #tpu.memory_space<vmem>>, vector<1x128xf32>
    %46 = vector.broadcast %45 : vector<1x128xf32> to vector<16x128xf32>
    %47 = arith.addf %44, %46 : vector<16x128xf32>
    %c0_37 = arith.constant 0 : index
    %c0_38 = arith.constant 0 : index
    %48 = vector.load %arg14[%c0_37, %c0_38] : memref<16x128xf32, #tpu.memory_space<vmem>>, vector<16x128xf32>
    tpu.vector_store %arg14[%c0_37, %c0_38], %47 {strides = array<i32>} : memref<16x128xf32, #tpu.memory_space<vmem>>, vector<16x128xf32>,
    return
  }
  func.func @transform_0(%arg0: i32) -> (i32, i32) {
    %c0_i32 = arith.constant 0 : i32
    %c0_i32_0 = arith.constant 0 : i32
    %c0_i32_1 = arith.constant 0 : i32
    return %c0_i32, %c0_i32_0 : i32, i32
  }
  func.func @transform_1(%arg0: i32) -> (i32, i32) {
    %c0_i32 = arith.constant 0 : i32
    %c0_i32_0 = arith.constant 0 : i32
    %c0_i32_1 = arith.constant 0 : i32
    return %c0_i32, %c0_i32_0 : i32, i32
  }
  func.func @transform_2(%arg0: i32) -> (i32, i32) {
    %c0_i32 = arith.constant 0 : i32
    %c0_i32_0 = arith.constant 0 : i32
    %c0_i32_1 = arith.constant 0 : i32
    return %c0_i32, %c0_i32_0 : i32, i32
  }
  func.func @transform_3(%arg0: i32) -> (i32, i32) {
    %c0_i32 = arith.constant 0 : i32
    %c0_i32_0 = arith.constant 0 : i32
    %c0_i32_1 = arith.constant 0 : i32
    return %c0_i32, %c0_i32_0 : i32, i32
  }
  func.func @transform_4(%arg0: i32) -> (i32, i32) {
    %c0_i32 = arith.constant 0 : i32
    %c0_i32_0 = arith.constant 0 : i32
    %c0_i32_1 = arith.constant 0 : i32
    return %c0_i32, %c0_i32_0 : i32, i32
  }
  func.func @transform_5(%arg0: i32) -> (i32, i32) {
    %c0_i32 = arith.constant 0 : i32
    %c0_i32_0 = arith.constant 0 : i32
    %c0_i32_1 = arith.constant 0 : i32
    return %c0_i32, %c0_i32_0 : i32, i32
  }
  func.func @transform_6(%arg0: i32) -> (i32, i32) {
    %c0_i32 = arith.constant 0 : i32
    %c0_i32_0 = arith.constant 0 : i32
    %c0_i32_1 = arith.constant 0 : i32
    return %c0_i32, %c0_i32_0 : i32, i32
  }
  func.func @transform_7(%arg0: i32) -> (i32, i32) {
    %c0_i32 = arith.constant 0 : i32
    %c0_i32_0 = arith.constant 0 : i32
    %c0_i32_1 = arith.constant 0 : i32
    return %c0_i32, %c0_i32_0 : i32, i32
  }
  func.func @transform_8(%arg0: i32) -> (i32, i32) {
    %c0_i32 = arith.constant 0 : i32
    %c0_i32_0 = arith.constant 0 : i32
    %c0_i32_1 = arith.constant 0 : i32
    return %c0_i32, %c0_i32_0 : i32, i32
  }
  func.func @transform_9(%arg0: i32) -> (i32, i32) {
    %c0_i32 = arith.constant 0 : i32
    %c0_i32_0 = arith.constant 0 : i32
    %c0_i32_1 = arith.constant 0 : i32
    return %c0_i32, %c0_i32_0 : i32, i32
  }
  func.func @transform_10(%arg0: i32) -> (i32, i32) {
    %c0_i32 = arith.constant 0 : i32
    %c0_i32_0 = arith.constant 0 : i32
    %c0_i32_1 = arith.constant 0 : i32
    return %c0_i32, %c0_i32_0 : i32, i32
  }
  func.func @transform_11(%arg0: i32) -> (i32, i32) {
    %c0_i32 = arith.constant 0 : i32
    %c0_i32_0 = arith.constant 0 : i32
    %c0_i32_1 = arith.constant 0 : i32
    return %c0_i32, %c0_i32_0 : i32, i32
  }
  func.func @transform_12(%arg0: i32) -> (i32, i32) {
    %c0_i32 = arith.constant 0 : i32
    %c0_i32_0 = arith.constant 0 : i32
    %c0_i32_1 = arith.constant 0 : i32
    return %c0_i32, %c0_i32_0 : i32, i32
  }
  func.func @transform_13(%arg0: i32) -> (i32, i32) {
    %c0_i32 = arith.constant 0 : i32
    %c0_i32_0 = arith.constant 0 : i32
    %c0_i32_1 = arith.constant 0 : i32
    return %c0_i32, %c0_i32_0 : i32, i32
  }
}

</mosaic_0001>

<llo_original>
// kernel: tpu_custom_call.1
$region0: #{tpu_custom_call.1}
  #allocation0 [shape = 'u32[]', space=smem, size = 0x4, offset = 0x4, fixed_abs, tag = 'smem constant byte address 0x4 - core index']
  #allocation1 [shape = 'u32[144,128]{1,0:T(1,128)}', space=vmem, size = 0x12000, scoped, tag = 'internal scratch']
  %s0 = inlined_call_operand.hbm [shape: bf16[128,128], index: 0, kind: input, shape index: {}]
  %s1 = inlined_call_operand.hbm [shape: bf16[128,128], index: 1, kind: input, shape index: {}]
  %s2 = inlined_call_operand.hbm [shape: bf16[16,128], index: 2, kind: input, shape index: {}]
  %s3 = inlined_call_operand.hbm [shape: bf16[128,128], index: 3, kind: input, shape index: {}]
  %s4 = inlined_call_operand.vmem [shape: f32[1,128], index: 4, kind: input, shape index: {}]
  %s5 = inlined_call_operand.hbm [shape: bf16[128,128], index: 5, kind: input, shape index: {}]
  %s6 = inlined_call_operand.vmem [shape: f32[1,128], index: 6, kind: input, shape index: {}]
  %s7 = inlined_call_operand.hbm [shape: bf16[128,128], index: 7, kind: input, shape index: {}]
  %s8 = inlined_call_operand.vmem [shape: f32[1,128], index: 8, kind: input, shape index: {}]
  %s9 = inlined_call_operand.hbm [shape: bf16[128,128], index: 9, kind: input, shape index: {}]
  %s10 = inlined_call_operand.vmem [shape: f32[1,128], index: 10, kind: input, shape index: {}]
  %s11 = inlined_call_operand.hbm [shape: bf16[128,128], index: 11, kind: input, shape index: {}]
  %s12 = inlined_call_operand.vmem [shape: f32[1,128], index: 12, kind: input, shape index: {}]
  %s13 = inlined_call_operand.hbm [shape: f32[16,128], index: 13, kind: output, shape index: {}]
  %s14 = sld [smem:[#allocation0]]
  $region94: #{tpu_custom_call.1} parent=0
    _
  %s16 = ssub.s32 1, %s14
  %s17 = scalar_select 0, %s16, %s14
  $region1: #{tpu_custom_call.1} parent=0
    #allocation2 [shape = 'u8[32768]{0}', space=vmem, size = 0x8000, scoped, tag = 'input window, operand 0, single buffered']
    #allocation3 [shape = 's32[1]{0}', space=sflag, size = 0x4, scoped, tag = 'scoped memory for tpu_custom_call.1']
    #allocation4 [shape = 's32[1]{0}', space=sflag, size = 0x4, scoped, tag = 'scoped memory for tpu_custom_call.1']
    #allocation5 [shape = 'u8[32768]{0}', space=vmem, size = 0x8000, scoped, tag = 'input window, operand 1, single buffered']
    #allocation6 [shape = 's32[1]{0}', space=sflag, size = 0x4, scoped, tag = 'scoped memory for tpu_custom_call.1']
    #allocation7 [shape = 'u8[4096]{0}', space=vmem, size = 0x1000, scoped, tag = 'input window, operand 2, single buffered']
    #allocation8 [shape = 'u8[32768]{0}', space=vmem, size = 0x8000, scoped, tag = 'input window, operand 3, single buffered']
    #allocation9 [shape = 's32[1]{0}', space=sflag, size = 0x4, scoped, tag = 'scoped memory for tpu_custom_call.1']
    #allocation10 [shape = 'u8[32768]{0}', space=vmem, size = 0x8000, scoped, tag = 'input window, operand 5, single buffered']
    #allocation11 [shape = 'u8[32768]{0}', space=vmem, size = 0x8000, scoped, tag = 'input window, operand 7, single buffered']
    #allocation12 [shape = 's32[1]{0}', space=sflag, size = 0x4, scoped, tag = 'scoped memory for tpu_custom_call.1']
    #allocation13 [shape = 'u8[32768]{0}', space=vmem, size = 0x8000, scoped, tag = 'input window, operand 9, single buffered']
    #allocation14 [shape = 'u8[32768]{0}', space=vmem, size = 0x8000, scoped, tag = 'input window, operand 11, single buffered']
    #allocation15 [shape = 's32[1]{0}', space=sflag, size = 0x4, scoped, tag = 'scoped memory for tpu_custom_call.1']
    #allocation16 [shape = 'u8[8192]{0}', space=vmem, size = 0x2000, scoped, tag = 'output window, operand 0, single buffered']
    %18 = vsyncpa [#allocation3], 0
    %19 = vsyncpa [#allocation6], 0
    %20 = vsyncpa [#allocation9], 0
    %21 = vsyncpa [#allocation12], 0
    %22 = vsyncpa [#allocation15], 0
    %23 = vsyncpa [#allocation4], 0
    // Predicated region
    $region2: #{tpu_custom_call.1} parent=1 // pred_check
      _
    $region3: #{tpu_custom_call.1} parent=1 // pred_check_branch
      %25 = sbr.rel (0) target = $region5
    $region4: #{tpu_custom_call.1} parent=1 // pred_region
      %s27 = ssub.s32 1024, 1024
      %28 = vsyncadd [#allocation3], %s27
      %s29 = sshll.u32 [#allocation2], 4
      %s30 = int_to_ptr.vmem [resolvable:$true] %s29
      %35 = dma.hbm_to_vmem [thread:$0]  %s0, 1024, %s30, [#allocation3], 64, 64, 4
    $region5: #{tpu_custom_call.1} parent=1 // pred_fallthru
      _
    // Predicated region
    $region6: #{tpu_custom_call.1} parent=1 // pred_check
      _
    $region7: #{tpu_custom_call.1} parent=1 // pred_check_branch
      %37 = sbr.rel (0) target = $region9
    $region8: #{tpu_custom_call.1} parent=1 // pred_region
      %s39 = ssub.s32 1024, 1024
      %40 = vsyncadd [#allocation6], %s39
      %s41 = sshll.u32 [#allocation5], 4
      %s42 = int_to_ptr.vmem [resolvable:$true] %s41
      %47 = dma.hbm_to_vmem [thread:$0]  %s1, 1024, %s42, [#allocation6], 64, 64, 4
    $region9: #{tpu_custom_call.1} parent=1 // pred_fallthru
      _
    // Predicated region
    $region10: #{tpu_custom_call.1} parent=1 // pred_check
      _
    $region11: #{tpu_custom_call.1} parent=1 // pred_check_branch
      %49 = sbr.rel (0) target = $region13
    $region12: #{tpu_custom_call.1} parent=1 // pred_region
      %s51 = ssub.s32 128, 128
      %52 = vsyncadd [#allocation6], %s51
      %s53 = sshll.u32 [#allocation7], 4
      %s54 = int_to_ptr.vmem [resolvable:$true] %s53
      %59 = dma.hbm_to_vmem [thread:$0]  %s2, 128, %s54, [#allocation6], 64, 64, 4
    $region13: #{tpu_custom_call.1} parent=1 // pred_fallthru
      _
    // Predicated region
    $region14: #{tpu_custom_call.1} parent=1 // pred_check
      _
    $region15: #{tpu_custom_call.1} parent=1 // pred_check_branch
      %61 = sbr.rel (0) target = $region17
    $region16: #{tpu_custom_call.1} parent=1 // pred_region
      %s63 = ssub.s32 1024, 1024
      %64 = vsyncadd [#allocation9], %s63
      %s65 = sshll.u32 [#allocation8], 4
      %s66 = int_to_ptr.vmem [resolvable:$true] %s65
      %71 = dma.hbm_to_vmem [thread:$0]  %s3, 1024, %s66, [#allocation9], 64, 64, 4
    $region17: #{tpu_custom_call.1} parent=1 // pred_fallthru
      _
    // Predicated region
    $region18: #{tpu_custom_call.1} parent=1 // pred_check
      _
    $region19: #{tpu_custom_call.1} parent=1 // pred_check_branch
      %73 = sbr.rel (0) target = $region21
    $region20: #{tpu_custom_call.1} parent=1 // pred_region
      _
    $region21: #{tpu_custom_call.1} parent=1 // pred_fallthru
      _
    // Predicated region
    $region22: #{tpu_custom_call.1} parent=1 // pred_check
      _
    $region23: #{tpu_custom_call.1} parent=1 // pred_check_branch
      %75 = sbr.rel (0) target = $region25
    $region24: #{tpu_custom_call.1} parent=1 // pred_region
      %s77 = ssub.s32 1024, 1024
      %78 = vsyncadd [#allocation9], %s77
      %s79 = sshll.u32 [#allocation10], 4
      %s80 = int_to_ptr.vmem [resolvable:$true] %s79
      %85 = dma.hbm_to_vmem [thread:$0]  %s5, 1024, %s80, [#allocation9], 64, 64, 4
    $region25: #{tpu_custom_call.1} parent=1 // pred_fallthru
      _
    // Predicated region
    $region26: #{tpu_custom_call.1} parent=1 // pred_check
      _
    $region27: #{tpu_custom_call.1} parent=1 // pred_check_branch
      %87 = sbr.rel (0) target = $region29
    $region28: #{tpu_custom_call.1} parent=1 // pred_region
      _
    $region29: #{tpu_custom_call.1} parent=1 // pred_fallthru
      _
    // Predicated region
    $region30: #{tpu_custom_call.1} parent=1 // pred_check
      _
    $region31: #{tpu_custom_call.1} parent=1 // pred_check_branch
      %89 = sbr.rel (0) target = $region33
    $region32: #{tpu_custom_call.1} parent=1 // pred_region
      %s91 = ssub.s32 1024, 1024
      %92 = vsyncadd [#allocation12], %s91
      %s93 = sshll.u32 [#allocation11], 4
      %s94 = int_to_ptr.vmem [resolvable:$true] %s93
      %99 = dma.hbm_to_vmem [thread:$0]  %s7, 1024, %s94, [#allocation12], 64, 64, 4
    $region33: #{tpu_custom_call.1} parent=1 // pred_fallthru
      _
    // Predicated region
    $region34: #{tpu_custom_call.1} parent=1 // pred_check
      _
    $region35: #{tpu_custom_call.1} parent=1 // pred_check_branch
      %101 = sbr.rel (0) target = $region37
    $region36: #{tpu_custom_call.1} parent=1 // pred_region
      _
    $region37: #{tpu_custom_call.1} parent=1 // pred_fallthru
      _
    // Predicated region
    $region38: #{tpu_custom_call.1} parent=1 // pred_check
      _
    $region39: #{tpu_custom_call.1} parent=1 // pred_check_branch
      %103 = sbr.rel (0) target = $region41
    $region40: #{tpu_custom_call.1} parent=1 // pred_region
      %s105 = ssub.s32 1024, 1024
      %106 = vsyncadd [#allocation12], %s105
      %s107 = sshll.u32 [#allocation13], 4
      %s108 = int_to_ptr.vmem [resolvable:$true] %s107
      %113 = dma.hbm_to_vmem [thread:$0]  %s9, 1024, %s108, [#allocation12], 64, 64, 4
    $region41: #{tpu_custom_call.1} parent=1 // pred_fallthru
      _
    // Predicated region
    $region42: #{tpu_custom_call.1} parent=1 // pred_check
      _
    $region43: #{tpu_custom_call.1} parent=1 // pred_check_branch
      %115 = sbr.rel (0) target = $region45
    $region44: #{tpu_custom_call.1} parent=1 // pred_region
      _
    $region45: #{tpu_custom_call.1} parent=1 // pred_fallthru
      _
    // Predicated region
    $region46: #{tpu_custom_call.1} parent=1 // pred_check
      _
    $region47: #{tpu_custom_call.1} parent=1 // pred_check_branch
      %117 = sbr.rel (0) target = $region49
    $region48: #{tpu_custom_call.1} parent=1 // pred_region
      %s119 = ssub.s32 1024, 1024
      %120 = vsyncadd [#allocation15], %s119
      %s121 = sshll.u32 [#allocation14], 4
      %s122 = int_to_ptr.vmem [resolvable:$true] %s121
      %127 = dma.hbm_to_vmem [thread:$0]  %s11, 1024, %s122, [#allocation15], 64, 64, 4
    $region49: #{tpu_custom_call.1} parent=1 // pred_fallthru
      _
    // Predicated region
    $region50: #{tpu_custom_call.1} parent=1 // pred_check
      _
    $region51: #{tpu_custom_call.1} parent=1 // pred_check_branch
      %129 = sbr.rel (0) target = $region53
    $region52: #{tpu_custom_call.1} parent=1 // pred_region
      _
    $region53: #{tpu_custom_call.1} parent=1 // pred_fallthru
      _
    // Predicated region
    $region54: #{tpu_custom_call.1} parent=1 // pred_check
      _
    $region55: #{tpu_custom_call.1} parent=1 // pred_check_branch
      %131 = sbr.rel (0) target = $region57
    $region56: #{tpu_custom_call.1} parent=1 // pred_region
      %132 = dma.done [#allocation3], 1024
    $region57: #{tpu_custom_call.1} parent=1 // pred_fallthru
      _
    // Predicated region
    $region58: #{tpu_custom_call.1} parent=1 // pred_check
      _
    $region59: #{tpu_custom_call.1} parent=1 // pred_check_branch
      %134 = sbr.rel (0) target = $region61
    $region60: #{tpu_custom_call.1} parent=1 // pred_region
      %135 = dma.done [#allocation6], 1024
    $region61: #{tpu_custom_call.1} parent=1 // pred_fallthru
      _
    // Predicated region
    $region62: #{tpu_custom_call.1} parent=1 // pred_check
      _
    $region63: #{tpu_custom_call.1} parent=1 // pred_check_branch
      %137 = sbr.rel (0) target = $region65
    $region64: #{tpu_custom_call.1} parent=1 // pred_region
      %138 = dma.done [#allocation6], 128
    $region65: #{tpu_custom_call.1} parent=1 // pred_fallthru
      _
    // Predicated region
    $region66: #{tpu_custom_call.1} parent=1 // pred_check
      _
    $region67: #{tpu_custom_call.1} parent=1 // pred_check_branch
      %140 = sbr.rel (0) target = $region69
    $region68: #{tpu_custom_call.1} parent=1 // pred_region
      %141 = dma.done [#allocation9], 1024
    $region69: #{tpu_custom_call.1} parent=1 // pred_fallthru
      _
    // Predicated region
    $region70: #{tpu_custom_call.1} parent=1 // pred_check
      _
    $region71: #{tpu_custom_call.1} parent=1 // pred_check_branch
      %143 = sbr.rel (0) target = $region73
    $region72: #{tpu_custom_call.1} parent=1 // pred_region
      %144 = dma.done [#allocation9], 1024
    $region73: #{tpu_custom_call.1} parent=1 // pred_fallthru
      _
    // Predicated region
    $region74: #{tpu_custom_call.1} parent=1 // pred_check
      _
    $region75: #{tpu_custom_call.1} parent=1 // pred_check_branch
      %146 = sbr.rel (0) target = $region77
    $region76: #{tpu_custom_call.1} parent=1 // pred_region
      %147 = dma.done [#allocation12], 1024
    $region77: #{tpu_custom_call.1} parent=1 // pred_fallthru
      _
    // Predicated region
    $region78: #{tpu_custom_call.1} parent=1 // pred_check
      _
    $region79: #{tpu_custom_call.1} parent=1 // pred_check_branch
      %149 = sbr.rel (0) target = $region81
    $region80: #{tpu_custom_call.1} parent=1 // pred_region
      %150 = dma.done [#allocation12], 1024
    $region81: #{tpu_custom_call.1} parent=1 // pred_fallthru
      _
    // Predicated region
    $region82: #{tpu_custom_call.1} parent=1 // pred_check
      _
    $region83: #{tpu_custom_call.1} parent=1 // pred_check_branch
      %152 = sbr.rel (0) target = $region85
    $region84: #{tpu_custom_call.1} parent=1 // pred_region
      %153 = dma.done [#allocation15], 1024
    $region85: #{tpu_custom_call.1} parent=1 // pred_fallthru
      _
    %v155 = vld [vmem:[#allocation2] sm:$0xf]
    %v156 = vld [vmem:[#allocation2 + $0x4] sm:$0xf]
    %v157 = vld [vmem:[#allocation2 + $0x8] sm:$0xf]
    %v158 = vld [vmem:[#allocation2 + $0xc] sm:$0xf]
    %v159 = vld [vmem:[#allocation2 + $0x10] sm:$0xf]
    %v160 = vld [vmem:[#allocation2 + $0x14] sm:$0xf]
    %v161 = vld [vmem:[#allocation2 + $0x18] sm:$0xf]
    %v162 = vld [vmem:[#allocation2 + $0x1c] sm:$0xf]
    %v163 = vld [vmem:[#allocation2 + $0x20] sm:$0xf]
    %v164 = vld [vmem:[#allocation2 + $0x24] sm:$0xf]
    %v165 = vld [vmem:[#allocation2 + $0x28] sm:$0xf]
    %v166 = vld [vmem:[#allocation2 + $0x2c] sm:$0xf]
    %v167 = vld [vmem:[#allocation2 + $0x30] sm:$0xf]
    %v168 = vld [vmem:[#allocation2 + $0x34] sm:$0xf]
    %v169 = vld [vmem:[#allocation2 + $0x38] sm:$0xf]
    %v170 = vld [vmem:[#allocation2 + $0x3c] sm:$0xf]
    %v171 = vld [vmem:[#allocation5] sm:$0xf]
    %v172 = vld [vmem:[#allocation5 + $0x4] sm:$0xf]
    %v173 = vld [vmem:[#allocation5 + $0x8] sm:$0xf]
    %v174 = vld [vmem:[#allocation5 + $0xc] sm:$0xf]
    %v175 = vld [vmem:[#allocation5 + $0x10] sm:$0xf]
    %v176 = vld [vmem:[#allocation5 + $0x14] sm:$0xf]
    %v177 = vld [vmem:[#allocation5 + $0x18] sm:$0xf]
    %v178 = vld [vmem:[#allocation5 + $0x1c] sm:$0xf]
    %v179 = vld [vmem:[#allocation5 + $0x20] sm:$0xf]
    %v180 = vld [vmem:[#allocation5 + $0x24] sm:$0xf]
    %v181 = vld [vmem:[#allocation5 + $0x28] sm:$0xf]
    %v182 = vld [vmem:[#allocation5 + $0x2c] sm:$0xf]
    %v183 = vld [vmem:[#allocation5 + $0x30] sm:$0xf]
    %v184 = vld [vmem:[#allocation5 + $0x34] sm:$0xf]
    %v185 = vld [vmem:[#allocation5 + $0x38] sm:$0xf]
    %v186 = vld [vmem:[#allocation5 + $0x3c] sm:$0xf]
    %v203 = vunpack.c.l.b16 %v155
    %v204 = vunpack.c.l.b16 %v156
    %v205 = vunpack.c.l.b16 %v157
    %v206 = vunpack.c.l.b16 %v158
    %v207 = vunpack.c.l.b16 %v159
    %v208 = vunpack.c.l.b16 %v160
    %v209 = vunpack.c.l.b16 %v161
    %v210 = vunpack.c.l.b16 %v162
    %v211 = vunpack.c.l.b16 %v163
    %v212 = vunpack.c.l.b16 %v164
    %v213 = vunpack.c.l.b16 %v165
    %v214 = vunpack.c.l.b16 %v166
    %v215 = vunpack.c.l.b16 %v167
    %v216 = vunpack.c.l.b16 %v168
    %v217 = vunpack.c.l.b16 %v169
    %v218 = vunpack.c.l.b16 %v170
    %v219 = vpack.c.b16 %v204, %v203
    %v220 = vpack.c.b16 %v206, %v205
    %v221 = vpack.c.b16 %v208, %v207
    %v222 = vpack.c.b16 %v210, %v209
    %v223 = vpack.c.b16 %v212, %v211
    %v224 = vpack.c.b16 %v214, %v213
    %v225 = vpack.c.b16 %v216, %v215
    %v226 = vpack.c.b16 %v218, %v217
    %v251 = vunpack.c.l.b16 %v171
    %v252 = vunpack.c.l.b16 %v172
    %v253 = vunpack.c.l.b16 %v173
    %v254 = vunpack.c.l.b16 %v174
    %v255 = vunpack.c.l.b16 %v175
    %v256 = vunpack.c.l.b16 %v176
    %v257 = vunpack.c.l.b16 %v177
    %v258 = vunpack.c.l.b16 %v178
    %v259 = vunpack.c.l.b16 %v179
    %v260 = vunpack.c.l.b16 %v180
    %v261 = vunpack.c.l.b16 %v181
    %v262 = vunpack.c.l.b16 %v182
    %v263 = vunpack.c.l.b16 %v183
    %v264 = vunpack.c.l.b16 %v184
    %v265 = vunpack.c.l.b16 %v185
    %v266 = vunpack.c.l.b16 %v186
    %v267 = vpack.c.b16 %v252, %v251
    %v268 = vpack.c.b16 %v254, %v253
    %v269 = vpack.c.b16 %v256, %v255
    %v270 = vpack.c.b16 %v258, %v257
    %v271 = vpack.c.b16 %v260, %v259
    %v272 = vpack.c.b16 %v262, %v261
    %v273 = vpack.c.b16 %v264, %v263
    %v274 = vpack.c.b16 %v266, %v265
    %283 = vmatprep.subr.bf16.mxu0 0
    %284 = vmatpush1.bf16.msra.mxu0 %v267
    %285 = vmatprep.subr.bf16.mxu0 0
    %286 = vmatpush1.bf16.msra.mxu0 %v268
    %287 = vmatprep.subr.bf16.mxu0 0
    %288 = vmatpush1.bf16.msra.mxu0 %v269
    %289 = vmatprep.subr.bf16.mxu0 0
    %290 = vmatpush1.bf16.msra.mxu0 %v270
    %291 = vmatprep.subr.bf16.mxu0 0
    %292 = vmatpush1.bf16.msra.mxu0 %v271
    %293 = vmatprep.subr.bf16.mxu0 0
    %294 = vmatpush1.bf16.msra.mxu0 %v272
    %295 = vmatprep.subr.bf16.mxu0 0
    %296 = vmatpush1.bf16.msra.mxu0 %v273
    %297 = vmatprep.subr.bf16.mxu0 0
    %298 = vmatpush1.bf16.msra.mxu0 %v274
    %299 = vmatprep.subr.bf16.mxu0 0
    %300 = vmatpush1.bf16.msra.mxu0 0
    %301 = vmatprep.subr.bf16.mxu0 0
    %302 = vmatpush1.bf16.msra.mxu0 0
    %303 = vmatprep.subr.bf16.mxu0 0
    %304 = vmatpush1.bf16.msra.mxu0 0
    %305 = vmatprep.subr.bf16.mxu0 0
    %306 = vmatpush1.bf16.msra.mxu0 0
    %307 = vmatprep.subr.bf16.mxu0 0
    %308 = vmatpush1.bf16.msra.mxu0 0
    %309 = vmatprep.subr.bf16.mxu0 0
    %310 = vmatpush1.bf16.msra.mxu0 0
    %311 = vmatprep.subr.bf16.mxu0 0
    %312 = vmatpush1.bf16.msra.mxu0 0
    %313 = vmatprep.subr.bf16.mxu0 0
    %314 = vmatpush1.bf16.msra.mxu0 0
    %315 = vmatprep.mubr.bf16.mxu0 0
    %316 = vmatmul.mubr.bf16.gmra.mrb[0].mxu0 %v219
    %v317 = vpop.f32.mrb[0].mxu0
    %v318 = vadd.f32 0.0, %v317
    %v319 = vpop.f32.mrb[0].mxu0
    %v320 = vpop.f32.mrb[0].mxu0
    %v321 = vadd.f32 0.0, %v320
    %v322 = vpop.f32.mrb[0].mxu0
    %323 = vmatprep.mubr.bf16.mxu0 0
    %324 = vmatmul.mubr.bf16.gmra.mrb[0].mxu0 %v220
    %v325 = vpop.f32.mrb[0].mxu0
    %v326 = vadd.f32 0.0, %v325
    %v327 = vpop.f32.mrb[0].mxu0
    %v328 = vpop.f32.mrb[0].mxu0
    %v329 = vadd.f32 0.0, %v328
    %v330 = vpop.f32.mrb[0].mxu0
    %331 = vmatprep.mubr.bf16.mxu0 0
    %332 = vmatmul.mubr.bf16.gmra.mrb[0].mxu0 %v221
    %v333 = vpop.f32.mrb[0].mxu0
    %v334 = vadd.f32 0.0, %v333
    %v335 = vpop.f32.mrb[0].mxu0
    %v336 = vpop.f32.mrb[0].mxu0
    %v337 = vadd.f32 0.0, %v336
    %v338 = vpop.f32.mrb[0].mxu0
    %339 = vmatprep.mubr.bf16.mxu0 0
    %340 = vmatmul.mubr.bf16.gmra.mrb[0].mxu0 %v222
    %v341 = vpop.f32.mrb[0].mxu0
    %v342 = vadd.f32 0.0, %v341
    %v343 = vpop.f32.mrb[0].mxu0
    %v344 = vpop.f32.mrb[0].mxu0
    %v345 = vadd.f32 0.0, %v344
    %v346 = vpop.f32.mrb[0].mxu0
    %347 = vmatprep.mubr.bf16.mxu0 0
    %348 = vmatmul.mubr.bf16.gmra.mrb[0].mxu0 %v223
    %v349 = vpop.f32.mrb[0].mxu0
    %v350 = vadd.f32 0.0, %v349
    %v351 = vpop.f32.mrb[0].mxu0
    %v352 = vpop.f32.mrb[0].mxu0
    %v353 = vadd.f32 0.0, %v352
    %v354 = vpop.f32.mrb[0].mxu0
    %355 = vmatprep.mubr.bf16.mxu0 0
    %356 = vmatmul.mubr.bf16.gmra.mrb[0].mxu0 %v224
    %v357 = vpop.f32.mrb[0].mxu0
    %v358 = vadd.f32 0.0, %v357
    %v359 = vpop.f32.mrb[0].mxu0
    %v360 = vpop.f32.mrb[0].mxu0
    %v361 = vadd.f32 0.0, %v360
    %v362 = vpop.f32.mrb[0].mxu0
    %363 = vmatprep.mubr.bf16.mxu0 0
    %364 = vmatmul.mubr.bf16.gmra.mrb[0].mxu0 %v225
    %v365 = vpop.f32.mrb[0].mxu0
    %v366 = vadd.f32 0.0, %v365
    %v367 = vpop.f32.mrb[0].mxu0
    %v368 = vpop.f32.mrb[0].mxu0
    %v369 = vadd.f32 0.0, %v368
    %v370 = vpop.f32.mrb[0].mxu0
    %371 = vmatprep.mubr.bf16.mxu0 0
    %372 = vmatmul.mubr.bf16.gmra.mrb[0].mxu0 %v226
    %v373 = vpop.f32.mrb[0].mxu0
    %v374 = vadd.f32 0.0, %v373
    %v375 = vpop.f32.mrb[0].mxu0
    %v376 = vpop.f32.mrb[0].mxu0
    %v377 = vadd.f32 0.0, %v376
    %v378 = vpop.f32.mrb[0].mxu0
    %379 = vdwg.mxu0
    %v380 = vpack.c.bf16 %v321, %v318
    %v381 = vpack.c.bf16 %v329, %v326
    %v382 = vpack.c.bf16 %v337, %v334
    %v383 = vpack.c.bf16 %v345, %v342
    %v384 = vpack.c.bf16 %v353, %v350
    %v385 = vpack.c.bf16 %v361, %v358
    %v386 = vpack.c.bf16 %v369, %v366
    %v387 = vpack.c.bf16 %v377, %v374
    %v388 = vld [vmem:[#allocation8] sm:$0xf]
    %v389 = vld [vmem:[#allocation8 + $0x4] sm:$0xf]
    %v390 = vld [vmem:[#allocation8 + $0x8] sm:$0xf]
    %v391 = vld [vmem:[#allocation8 + $0xc] sm:$0xf]
    %v392 = vld [vmem:[#allocation8 + $0x10] sm:$0xf]
    %v393 = vld [vmem:[#allocation8 + $0x14] sm:$0xf]
    %v394 = vld [vmem:[#allocation8 + $0x18] sm:$0xf]
    %v395 = vld [vmem:[#allocation8 + $0x1c] sm:$0xf]
    %v396 = vld [vmem:[#allocation8 + $0x20] sm:$0xf]
    %v397 = vld [vmem:[#allocation8 + $0x24] sm:$0xf]
    %v398 = vld [vmem:[#allocation8 + $0x28] sm:$0xf]
    %v399 = vld [vmem:[#allocation8 + $0x2c] sm:$0xf]
    %v400 = vld [vmem:[#allocation8 + $0x30] sm:$0xf]
    %v401 = vld [vmem:[#allocation8 + $0x34] sm:$0xf]
    %v402 = vld [vmem:[#allocation8 + $0x38] sm:$0xf]
    %v403 = vld [vmem:[#allocation8 + $0x3c] sm:$0xf]
    %v404 = vld [vmem:[%s4] sm:$0x1]
    %v406 = vlaneseq
    %v407 = vshrl.u32 %v406, 7
    %v408 = vsub.s32 0, %v407
    %v409 = vrot.slane %v404, %v408
    %v427 = vunpack.c.l.b16 %v388
    %v428 = vunpack.c.l.b16 %v389
    %v429 = vunpack.c.l.b16 %v390
    %v430 = vunpack.c.l.b16 %v391
    %v431 = vunpack.c.l.b16 %v392
    %v432 = vunpack.c.l.b16 %v393
    %v433 = vunpack.c.l.b16 %v394
    %v434 = vunpack.c.l.b16 %v395
    %v435 = vunpack.c.l.b16 %v396
    %v436 = vunpack.c.l.b16 %v397
    %v437 = vunpack.c.l.b16 %v398
    %v438 = vunpack.c.l.b16 %v399
    %v439 = vunpack.c.l.b16 %v400
    %v440 = vunpack.c.l.b16 %v401
    %v441 = vunpack.c.l.b16 %v402
    %v442 = vunpack.c.l.b16 %v403
    %v443 = vpack.c.b16 %v428, %v427
    %v444 = vpack.c.b16 %v430, %v429
    %v445 = vpack.c.b16 %v432, %v431
    %v446 = vpack.c.b16 %v434, %v433
    %v447 = vpack.c.b16 %v436, %v435
    %v448 = vpack.c.b16 %v438, %v437
    %v449 = vpack.c.b16 %v440, %v439
    %v450 = vpack.c.b16 %v442, %v441
    %459 = vmatprep.subr.bf16.mxu0 0
    %460 = vmatpush1.bf16.msra.mxu0 %v443
    %461 = vmatprep.subr.bf16.mxu0 0
    %462 = vmatpush1.bf16.msra.mxu0 %v444
    %463 = vmatprep.subr.bf16.mxu0 0
    %464 = vmatpush1.bf16.msra.mxu0 %v445
    %465 = vmatprep.subr.bf16.mxu0 0
    %466 = vmatpush1.bf16.msra.mxu0 %v446
    %467 = vmatprep.subr.bf16.mxu0 0
    %468 = vmatpush1.bf16.msra.mxu0 %v447
    %469 = vmatprep.subr.bf16.mxu0 0
    %470 = vmatpush1.bf16.msra.mxu0 %v448
    %471 = vmatprep.subr.bf16.mxu0 0
    %472 = vmatpush1.bf16.msra.mxu0 %v449
    %473 = vmatprep.subr.bf16.mxu0 0
    %474 = vmatpush1.bf16.msra.mxu0 %v450
    %475 = vmatprep.subr.bf16.mxu0 0
    %476 = vmatpush1.bf16.msra.mxu0 0
    %477 = vmatprep.subr.bf16.mxu0 0
    %478 = vmatpush1.bf16.msra.mxu0 0
    %479 = vmatprep.subr.bf16.mxu0 0
    %480 = vmatpush1.bf16.msra.mxu0 0
    %481 = vmatprep.subr.bf16.mxu0 0
    %482 = vmatpush1.bf16.msra.mxu0 0
    %483 = vmatprep.subr.bf16.mxu0 0
    %484 = vmatpush1.bf16.msra.mxu0 0
    %485 = vmatprep.subr.bf16.mxu0 0
    %486 = vmatpush1.bf16.msra.mxu0 0
    %487 = vmatprep.subr.bf16.mxu0 0
    %488 = vmatpush1.bf16.msra.mxu0 0
    %489 = vmatprep.subr.bf16.mxu0 0
    %490 = vmatpush1.bf16.msra.mxu0 0
    %491 = vmatprep.mubr.bf16.mxu0 0
    %492 = vmatmul.mubr.bf16.gmra.mrb[0].mxu0 %v380
    %v493 = vpop.f32.mrb[0].mxu0
    %v494 = vadd.f32 %v409, %v493
    %v495 = vpop.f32.mrb[0].mxu0
    %v496 = vpop.f32.mrb[0].mxu0
    %v497 = vadd.f32 %v409, %v496
    %v498 = vpop.f32.mrb[0].mxu0
    %499 = vmatprep.mubr.bf16.mxu0 0
    %500 = vmatmul.mubr.bf16.gmra.mrb[0].mxu0 %v381
    %v501 = vpop.f32.mrb[0].mxu0
    %v502 = vadd.f32 %v409, %v501
    %v503 = vpop.f32.mrb[0].mxu0
    %v504 = vpop.f32.mrb[0].mxu0
    %v505 = vadd.f32 %v409, %v504
    %v506 = vpop.f32.mrb[0].mxu0
    %507 = vmatprep.mubr.bf16.mxu0 0
    %508 = vmatmul.mubr.bf16.gmra.mrb[0].mxu0 %v382
    %v509 = vpop.f32.mrb[0].mxu0
    %v510 = vadd.f32 %v409, %v509
    %v511 = vpop.f32.mrb[0].mxu0
    %v512 = vpop.f32.mrb[0].mxu0
    %v513 = vadd.f32 %v409, %v512
    %v514 = vpop.f32.mrb[0].mxu0
    %515 = vmatprep.mubr.bf16.mxu0 0
    %516 = vmatmul.mubr.bf16.gmra.mrb[0].mxu0 %v383
    %v517 = vpop.f32.mrb[0].mxu0
    %v518 = vadd.f32 %v409, %v517
    %v519 = vpop.f32.mrb[0].mxu0
    %v520 = vpop.f32.mrb[0].mxu0
    %v521 = vadd.f32 %v409, %v520
    %v522 = vpop.f32.mrb[0].mxu0
    %523 = vmatprep.mubr.bf16.mxu0 0
    %524 = vmatmul.mubr.bf16.gmra.mrb[0].mxu0 %v384
    %v525 = vpop.f32.mrb[0].mxu0
    %v526 = vadd.f32 %v409, %v525
    %v527 = vpop.f32.mrb[0].mxu0
    %v528 = vpop.f32.mrb[0].mxu0
    %v529 = vadd.f32 %v409, %v528
    %v530 = vpop.f32.mrb[0].mxu0
    %531 = vmatprep.mubr.bf16.mxu0 0
    %532 = vmatmul.mubr.bf16.gmra.mrb[0].mxu0 %v385
    %v533 = vpop.f32.mrb[0].mxu0
    %v534 = vadd.f32 %v409, %v533
    %v535 = vpop.f32.mrb[0].mxu0
    %v536 = vpop.f32.mrb[0].mxu0
    %v537 = vadd.f32 %v409, %v536
    %v538 = vpop.f32.mrb[0].mxu0
    %539 = vmatprep.mubr.bf16.mxu0 0
    %540 = vmatmul.mubr.bf16.gmra.mrb[0].mxu0 %v386
    %v541 = vpop.f32.mrb[0].mxu0
    %v542 = vadd.f32 %v409, %v541
    %v543 = vpop.f32.mrb[0].mxu0
    %v544 = vpop.f32.mrb[0].mxu0
    %v545 = vadd.f32 %v409, %v544
    %v546 = vpop.f32.mrb[0].mxu0
    %547 = vmatprep.mubr.bf16.mxu0 0
    %548 = vmatmul.mubr.bf16.gmra.mrb[0].mxu0 %v387
    %v549 = vpop.f32.mrb[0].mxu0
    %v550 = vadd.f32 %v409, %v549
    %v551 = vpop.f32.mrb[0].mxu0
    %v552 = vpop.f32.mrb[0].mxu0
    %v553 = vadd.f32 %v409, %v552
    %v554 = vpop.f32.mrb[0].mxu0
    %555 = vdwg.mxu0
    %v556 = vmax.f32 %v494, 0.0
    %v557 = vmax.f32 %v497, 0.0
    %v558 = vmax.f32 %v502, 0.0
    %v559 = vmax.f32 %v505, 0.0
    %v560 = vmax.f32 %v510, 0.0
    %v561 = vmax.f32 %v513, 0.0
    %v562 = vmax.f32 %v518, 0.0
    %v563 = vmax.f32 %v521, 0.0
    %v564 = vmax.f32 %v526, 0.0
    %v565 = vmax.f32 %v529, 0.0
    %v566 = vmax.f32 %v534, 0.0
    %v567 = vmax.f32 %v537, 0.0
    %v568 = vmax.f32 %v542, 0.0
    %v569 = vmax.f32 %v545, 0.0
    %v570 = vmax.f32 %v550, 0.0
    %v571 = vmax.f32 %v553, 0.0
    %v572 = vpack.c.bf16 %v557, %v556
    %v573 = vpack.c.bf16 %v559, %v558
    %v574 = vpack.c.bf16 %v561, %v560
    %v575 = vpack.c.bf16 %v563, %v562
    %v576 = vpack.c.bf16 %v565, %v564
    %v577 = vpack.c.bf16 %v567, %v566
    %v578 = vpack.c.bf16 %v569, %v568
    %v579 = vpack.c.bf16 %v571, %v570
    %580 = vmatprep.subr.bf16.mxu0 0
    %581 = vmatpush1.bf16.msra.mxu0 %v572
    %582 = vmatprep.subr.bf16.mxu0 0
    %583 = vmatpush1.bf16.msra.mxu0 %v573
    %584 = vmatprep.subr.bf16.mxu0 0
    %585 = vmatpush1.bf16.msra.mxu0 %v574
    %586 = vmatprep.subr.bf16.mxu0 0
    %587 = vmatpush1.bf16.msra.mxu0 %v575
    %588 = vmatprep.subr.bf16.mxu0 0
    %589 = vmatpush1.bf16.msra.mxu0 %v576
    %590 = vmatprep.subr.bf16.mxu0 0
    %591 = vmatpush1.bf16.msra.mxu0 %v577
    %592 = vmatprep.subr.bf16.mxu0 0
    %593 = vmatpush1.bf16.msra.mxu0 %v578
    %594 = vmatprep.subr.bf16.mxu0 0
    %595 = vmatpush1.bf16.msra.mxu0 %v579
    %596 = vmatprep.subr.bf16.mxu0 0
    %597 = vmatpush1.bf16.msra.mxu0 0
    %598 = vmatprep.subr.bf16.mxu0 0
    %599 = vmatpush1.bf16.msra.mxu0 0
    %600 = vmatprep.subr.bf16.mxu0 0
    %601 = vmatpush1.bf16.msra.mxu0 0
    %602 = vmatprep.subr.bf16.mxu0 0
    %603 = vmatpush1.bf16.msra.mxu0 0
    %604 = vmatprep.subr.bf16.mxu0 0
    %605 = vmatpush1.bf16.msra.mxu0 0
    %606 = vmatprep.subr.bf16.mxu0 0
    %607 = vmatpush1.bf16.msra.mxu0 0
    %608 = vmatprep.subr.bf16.mxu0 0
    %609 = vmatpush1.bf16.msra.mxu0 0
    %610 = vmatprep.subr.bf16.mxu0 0
    %611 = vmatpush1.bf16.msra.mxu0 0
    %612 = vmatprep.mubr.bf16.mxu0 0
    %613 = vmatmul.mubr.bf16.gmra.mrb[0].mxu0 %v219
    %v614 = vpop.f32.mrb[0].mxu0
    %v615 = vadd.f32 0.0, %v614
    %v616 = vpop.f32.mrb[0].mxu0
    %v617 = vpop.f32.mrb[0].mxu0
    %v618 = vadd.f32 0.0, %v617
    %v619 = vpop.f32.mrb[0].mxu0
    %620 = vmatprep.mubr.bf16.mxu0 0
    %621 = vmatmul.mubr.bf16.gmra.mrb[0].mxu0 %v220
    %v622 = vpop.f32.mrb[0].mxu0
    %v623 = vadd.f32 0.0, %v622
    %v624 = vpop.f32.mrb[0].mxu0
    %v625 = vpop.f32.mrb[0].mxu0
    %v626 = vadd.f32 0.0, %v625
    %v627 = vpop.f32.mrb[0].mxu0
    %628 = vmatprep.mubr.bf16.mxu0 0
    %629 = vmatmul.mubr.bf16.gmra.mrb[0].mxu0 %v221
    %v630 = vpop.f32.mrb[0].mxu0
    %v631 = vadd.f32 0.0, %v630
    %v632 = vpop.f32.mrb[0].mxu0
    %v633 = vpop.f32.mrb[0].mxu0
    %v634 = vadd.f32 0.0, %v633
    %v635 = vpop.f32.mrb[0].mxu0
    %636 = vmatprep.mubr.bf16.mxu0 0
    %637 = vmatmul.mubr.bf16.gmra.mrb[0].mxu0 %v222
    %v638 = vpop.f32.mrb[0].mxu0
    %v639 = vadd.f32 0.0, %v638
    %v640 = vpop.f32.mrb[0].mxu0
    %v641 = vpop.f32.mrb[0].mxu0
    %v642 = vadd.f32 0.0, %v641
    %v643 = vpop.f32.mrb[0].mxu0
    %644 = vmatprep.mubr.bf16.mxu0 0
    %645 = vmatmul.mubr.bf16.gmra.mrb[0].mxu0 %v223
    %v646 = vpop.f32.mrb[0].mxu0
    %v647 = vadd.f32 0.0, %v646
    %v648 = vpop.f32.mrb[0].mxu0
    %v649 = vpop.f32.mrb[0].mxu0
    %v650 = vadd.f32 0.0, %v649
    %v651 = vpop.f32.mrb[0].mxu0
    %652 = vmatprep.mubr.bf16.mxu0 0
    %653 = vmatmul.mubr.bf16.gmra.mrb[0].mxu0 %v224
    %v654 = vpop.f32.mrb[0].mxu0
    %v655 = vadd.f32 0.0, %v654
    %v656 = vpop.f32.mrb[0].mxu0
    %v657 = vpop.f32.mrb[0].mxu0
    %v658 = vadd.f32 0.0, %v657
    %v659 = vpop.f32.mrb[0].mxu0
    %660 = vmatprep.mubr.bf16.mxu0 0
    %661 = vmatmul.mubr.bf16.gmra.mrb[0].mxu0 %v225
    %v662 = vpop.f32.mrb[0].mxu0
    %v663 = vadd.f32 0.0, %v662
    %v664 = vpop.f32.mrb[0].mxu0
    %v665 = vpop.f32.mrb[0].mxu0
    %v666 = vadd.f32 0.0, %v665
    %v667 = vpop.f32.mrb[0].mxu0
    %668 = vmatprep.mubr.bf16.mxu0 0
    %669 = vmatmul.mubr.bf16.gmra.mrb[0].mxu0 %v226
    %v670 = vpop.f32.mrb[0].mxu0
    %v671 = vadd.f32 0.0, %v670
    %v672 = vpop.f32.mrb[0].mxu0
    %v673 = vpop.f32.mrb[0].mxu0
    %v674 = vadd.f32 0.0, %v673
    %v675 = vpop.f32.mrb[0].mxu0
    %676 = vdwg.mxu0
    %v677 = vpack.c.bf16 %v618, %v615
    %v678 = vpack.c.bf16 %v626, %v623
    %v679 = vpack.c.bf16 %v634, %v631
    %v680 = vpack.c.bf16 %v642, %v639
    %v681 = vpack.c.bf16 %v650, %v647
    %v682 = vpack.c.bf16 %v658, %v655
    %v683 = vpack.c.bf16 %v666, %v663
    %v684 = vpack.c.bf16 %v674, %v671
    %v685 = vld [vmem:[#allocation10] sm:$0xf]
    %v686 = vld [vmem:[#allocation10 + $0x4] sm:$0xf]
    %v687 = vld [vmem:[#allocation10 + $0x8] sm:$0xf]
    %v688 = vld [vmem:[#allocation10 + $0xc] sm:$0xf]
    %v689 = vld [vmem:[#allocation10 + $0x10] sm:$0xf]
    %v690 = vld [vmem:[#allocation10 + $0x14] sm:$0xf]
    %v691 = vld [vmem:[#allocation10 + $0x18] sm:$0xf]
    %v692 = vld [vmem:[#allocation10 + $0x1c] sm:$0xf]
    %v693 = vld [vmem:[#allocation10 + $0x20] sm:$0xf]
    %v694 = vld [vmem:[#allocation10 + $0x24] sm:$0xf]
    %v695 = vld [vmem:[#allocation10 + $0x28] sm:$0xf]
    %v696 = vld [vmem:[#allocation10 + $0x2c] sm:$0xf]
    %v697 = vld [vmem:[#allocation10 + $0x30] sm:$0xf]
    %v698 = vld [vmem:[#allocation10 + $0x34] sm:$0xf]
    %v699 = vld [vmem:[#allocation10 + $0x38] sm:$0xf]
    %v700 = vld [vmem:[#allocation10 + $0x3c] sm:$0xf]
    %v701 = vld [vmem:[%s6] sm:$0x1]
    %v703 = vlaneseq
    %v704 = vshrl.u32 %v703, 7
    %v705 = vsub.s32 0, %v704
    %v706 = vrot.slane %v701, %v705
    %v724 = vunpack.c.l.b16 %v685
    %v725 = vunpack.c.l.b16 %v686
    %v726 = vunpack.c.l.b16 %v687
    %v727 = vunpack.c.l.b16 %v688
    %v728 = vunpack.c.l.b16 %v689
    %v729 = vunpack.c.l.b16 %v690
    %v730 = vunpack.c.l.b16 %v691
    %v731 = vunpack.c.l.b16 %v692
    %v732 = vunpack.c.l.b16 %v693
    %v733 = vunpack.c.l.b16 %v694
    %v734 = vunpack.c.l.b16 %v695
    %v735 = vunpack.c.l.b16 %v696
    %v736 = vunpack.c.l.b16 %v697
    %v737 = vunpack.c.l.b16 %v698
    %v738 = vunpack.c.l.b16 %v699
    %v739 = vunpack.c.l.b16 %v700
    %v740 = vpack.c.b16 %v725, %v724
    %v741 = vpack.c.b16 %v727, %v726
    %v742 = vpack.c.b16 %v729, %v728
    %v743 = vpack.c.b16 %v731, %v730
    %v744 = vpack.c.b16 %v733, %v732
    %v745 = vpack.c.b16 %v735, %v734
    %v746 = vpack.c.b16 %v737, %v736
    %v747 = vpack.c.b16 %v739, %v738
    %756 = vmatprep.subr.bf16.mxu0 0
    %757 = vmatpush1.bf16.msra.mxu0 %v740
    %758 = vmatprep.subr.bf16.mxu0 0
    %759 = vmatpush1.bf16.msra.mxu0 %v741
    %760 = vmatprep.subr.bf16.mxu0 0
    %761 = vmatpush1.bf16.msra.mxu0 %v742
    %762 = vmatprep.subr.bf16.mxu0 0
    %763 = vmatpush1.bf16.msra.mxu0 %v743
    %764 = vmatprep.subr.bf16.mxu0 0
    %765 = vmatpush1.bf16.msra.mxu0 %v744
    %766 = vmatprep.subr.bf16.mxu0 0
    %767 = vmatpush1.bf16.msra.mxu0 %v745
    %768 = vmatprep.subr.bf16.mxu0 0
    %769 = vmatpush1.bf16.msra.mxu0 %v746
    %770 = vmatprep.subr.bf16.mxu0 0
    %771 = vmatpush1.bf16.msra.mxu0 %v747
    %772 = vmatprep.subr.bf16.mxu0 0
    %773 = vmatpush1.bf16.msra.mxu0 0
    %774 = vmatprep.subr.bf16.mxu0 0
    %775 = vmatpush1.bf16.msra.mxu0 0
    %776 = vmatprep.subr.bf16.mxu0 0
    %777 = vmatpush1.bf16.msra.mxu0 0
    %778 = vmatprep.subr.bf16.mxu0 0
    %779 = vmatpush1.bf16.msra.mxu0 0
    %780 = vmatprep.subr.bf16.mxu0 0
    %781 = vmatpush1.bf16.msra.mxu0 0
    %782 = vmatprep.subr.bf16.mxu0 0
    %783 = vmatpush1.bf16.msra.mxu0 0
    %784 = vmatprep.subr.bf16.mxu0 0
    %785 = vmatpush1.bf16.msra.mxu0 0
    %786 = vmatprep.subr.bf16.mxu0 0
    %787 = vmatpush1.bf16.msra.mxu0 0
    %788 = vmatprep.mubr.bf16.mxu0 0
    %789 = vmatmul.mubr.bf16.gmra.mrb[0].mxu0 %v677
    %v790 = vpop.f32.mrb[0].mxu0
    %v791 = vadd.f32 %v706, %v790
    %v792 = vpop.f32.mrb[0].mxu0
    %v793 = vpop.f32.mrb[0].mxu0
    %v794 = vadd.f32 %v706, %v793
    %v795 = vpop.f32.mrb[0].mxu0
    %796 = vmatprep.mubr.bf16.mxu0 0
    %797 = vmatmul.mubr.bf16.gmra.mrb[0].mxu0 %v678
    %v798 = vpop.f32.mrb[0].mxu0
    %v799 = vadd.f32 %v706, %v798
    %v800 = vpop.f32.mrb[0].mxu0
    %v801 = vpop.f32.mrb[0].mxu0
    %v802 = vadd.f32 %v706, %v801
    %v803 = vpop.f32.mrb[0].mxu0
    %804 = vmatprep.mubr.bf16.mxu0 0
    %805 = vmatmul.mubr.bf16.gmra.mrb[0].mxu0 %v679
    %v806 = vpop.f32.mrb[0].mxu0
    %v807 = vadd.f32 %v706, %v806
    %v808 = vpop.f32.mrb[0].mxu0
    %v809 = vpop.f32.mrb[0].mxu0
    %v810 = vadd.f32 %v706, %v809
    %v811 = vpop.f32.mrb[0].mxu0
    %812 = vmatprep.mubr.bf16.mxu0 0
    %813 = vmatmul.mubr.bf16.gmra.mrb[0].mxu0 %v680
    %v814 = vpop.f32.mrb[0].mxu0
    %v815 = vadd.f32 %v706, %v814
    %v816 = vpop.f32.mrb[0].mxu0
    %v817 = vpop.f32.mrb[0].mxu0
    %v818 = vadd.f32 %v706, %v817
    %v819 = vpop.f32.mrb[0].mxu0
    %820 = vmatprep.mubr.bf16.mxu0 0
    %821 = vmatmul.mubr.bf16.gmra.mrb[0].mxu0 %v681
    %v822 = vpop.f32.mrb[0].mxu0
    %v823 = vadd.f32 %v706, %v822
    %v824 = vpop.f32.mrb[0].mxu0
    %v825 = vpop.f32.mrb[0].mxu0
    %v826 = vadd.f32 %v706, %v825
    %v827 = vpop.f32.mrb[0].mxu0
    %828 = vmatprep.mubr.bf16.mxu0 0
    %829 = vmatmul.mubr.bf16.gmra.mrb[0].mxu0 %v682
    %v830 = vpop.f32.mrb[0].mxu0
    %v831 = vadd.f32 %v706, %v830
    %v832 = vpop.f32.mrb[0].mxu0
    %v833 = vpop.f32.mrb[0].mxu0
    %v834 = vadd.f32 %v706, %v833
    %v835 = vpop.f32.mrb[0].mxu0
    %836 = vmatprep.mubr.bf16.mxu0 0
    %837 = vmatmul.mubr.bf16.gmra.mrb[0].mxu0 %v683
    %v838 = vpop.f32.mrb[0].mxu0
    %v839 = vadd.f32 %v706, %v838
    %v840 = vpop.f32.mrb[0].mxu0
    %v841 = vpop.f32.mrb[0].mxu0
    %v842 = vadd.f32 %v706, %v841
    %v843 = vpop.f32.mrb[0].mxu0
    %844 = vmatprep.mubr.bf16.mxu0 0
    %845 = vmatmul.mubr.bf16.gmra.mrb[0].mxu0 %v684
    %v846 = vpop.f32.mrb[0].mxu0
    %v847 = vadd.f32 %v706, %v846
    %v848 = vpop.f32.mrb[0].mxu0
    %v849 = vpop.f32.mrb[0].mxu0
    %v850 = vadd.f32 %v706, %v849
    %v851 = vpop.f32.mrb[0].mxu0
    %852 = vdwg.mxu0
    %v853 = vmax.f32 %v791, 0.0
    %v854 = vmax.f32 %v794, 0.0
    %v855 = vmax.f32 %v799, 0.0
    %v856 = vmax.f32 %v802, 0.0
    %v857 = vmax.f32 %v807, 0.0
    %v858 = vmax.f32 %v810, 0.0
    %v859 = vmax.f32 %v815, 0.0
    %v860 = vmax.f32 %v818, 0.0
    %v861 = vmax.f32 %v823, 0.0
    %v862 = vmax.f32 %v826, 0.0
    %v863 = vmax.f32 %v831, 0.0
    %v864 = vmax.f32 %v834, 0.0
    %v865 = vmax.f32 %v839, 0.0
    %v866 = vmax.f32 %v842, 0.0
    %v867 = vmax.f32 %v847, 0.0
    %v868 = vmax.f32 %v850, 0.0
    %v869 = vpack.c.bf16 %v854, %v853
    %v870 = vpack.c.bf16 %v856, %v855
    %v871 = vpack.c.bf16 %v858, %v857
    %v872 = vpack.c.bf16 %v860, %v859
    %v873 = vpack.c.bf16 %v862, %v861
    %v874 = vpack.c.bf16 %v864, %v863
    %v875 = vpack.c.bf16 %v866, %v865
    %v876 = vpack.c.bf16 %v868, %v867
    %877 = vmatprep.subr.bf16.mxu0 0
    %878 = vmatpush1.bf16.msra.mxu0 %v869
    %879 = vmatprep.subr.bf16.mxu0 0
    %880 = vmatpush1.bf16.msra.mxu0 %v870
    %881 = vmatprep.subr.bf16.mxu0 0
    %882 = vmatpush1.bf16.msra.mxu0 %v871
    %883 = vmatprep.subr.bf16.mxu0 0
    %884 = vmatpush1.bf16.msra.mxu0 %v872
    %885 = vmatprep.subr.bf16.mxu0 0
    %886 = vmatpush1.bf16.msra.mxu0 %v873
    %887 = vmatprep.subr.bf16.mxu0 0
    %888 = vmatpush1.bf16.msra.mxu0 %v874
    %889 = vmatprep.subr.bf16.mxu0 0
    %890 = vmatpush1.bf16.msra.mxu0 %v875
    %891 = vmatprep.subr.bf16.mxu0 0
    %892 = vmatpush1.bf16.msra.mxu0 %v876
    %893 = vmatprep.subr.bf16.mxu0 0
    %894 = vmatpush1.bf16.msra.mxu0 0
    %895 = vmatprep.subr.bf16.mxu0 0
    %896 = vmatpush1.bf16.msra.mxu0 0
    %897 = vmatprep.subr.bf16.mxu0 0
    %898 = vmatpush1.bf16.msra.mxu0 0
    %899 = vmatprep.subr.bf16.mxu0 0
    %900 = vmatpush1.bf16.msra.mxu0 0
    %901 = vmatprep.subr.bf16.mxu0 0
    %902 = vmatpush1.bf16.msra.mxu0 0
    %903 = vmatprep.subr.bf16.mxu0 0
    %904 = vmatpush1.bf16.msra.mxu0 0
    %905 = vmatprep.subr.bf16.mxu0 0
    %906 = vmatpush1.bf16.msra.mxu0 0
    %907 = vmatprep.subr.bf16.mxu0 0
    %908 = vmatpush1.bf16.msra.mxu0 0
    %909 = vmatprep.mubr.bf16.mxu0 0
    %910 = vmatmul.mubr.bf16.gmra.mrb[0].mxu0 %v219
    %v911 = vpop.f32.mrb[0].mxu0
    %v912 = vadd.f32 0.0, %v911
    %v913 = vpop.f32.mrb[0].mxu0
    %v914 = vpop.f32.mrb[0].mxu0
    %v915 = vadd.f32 0.0, %v914
    %v916 = vpop.f32.mrb[0].mxu0
    %917 = vmatprep.mubr.bf16.mxu0 0
    %918 = vmatmul.mubr.bf16.gmra.mrb[0].mxu0 %v220
    %v919 = vpop.f32.mrb[0].mxu0
    %v920 = vadd.f32 0.0, %v919
    %v921 = vpop.f32.mrb[0].mxu0
    %v922 = vpop.f32.mrb[0].mxu0
    %v923 = vadd.f32 0.0, %v922
    %v924 = vpop.f32.mrb[0].mxu0
    %925 = vmatprep.mubr.bf16.mxu0 0
    %926 = vmatmul.mubr.bf16.gmra.mrb[0].mxu0 %v221
    %v927 = vpop.f32.mrb[0].mxu0
    %v928 = vadd.f32 0.0, %v927
    %v929 = vpop.f32.mrb[0].mxu0
    %v930 = vpop.f32.mrb[0].mxu0
    %v931 = vadd.f32 0.0, %v930
    %v932 = vpop.f32.mrb[0].mxu0
    %933 = vmatprep.mubr.bf16.mxu0 0
    %934 = vmatmul.mubr.bf16.gmra.mrb[0].mxu0 %v222
    %v935 = vpop.f32.mrb[0].mxu0
    %v936 = vadd.f32 0.0, %v935
    %v937 = vpop.f32.mrb[0].mxu0
    %v938 = vpop.f32.mrb[0].mxu0
    %v939 = vadd.f32 0.0, %v938
    %v940 = vpop.f32.mrb[0].mxu0
    %941 = vmatprep.mubr.bf16.mxu0 0
    %942 = vmatmul.mubr.bf16.gmra.mrb[0].mxu0 %v223
    %v943 = vpop.f32.mrb[0].mxu0
    %v944 = vadd.f32 0.0, %v943
    %v945 = vpop.f32.mrb[0].mxu0
    %v946 = vpop.f32.mrb[0].mxu0
    %v947 = vadd.f32 0.0, %v946
    %v948 = vpop.f32.mrb[0].mxu0
    %949 = vmatprep.mubr.bf16.mxu0 0
    %950 = vmatmul.mubr.bf16.gmra.mrb[0].mxu0 %v224
    %v951 = vpop.f32.mrb[0].mxu0
    %v952 = vadd.f32 0.0, %v951
    %v953 = vpop.f32.mrb[0].mxu0
    %v954 = vpop.f32.mrb[0].mxu0
    %v955 = vadd.f32 0.0, %v954
    %v956 = vpop.f32.mrb[0].mxu0
    %957 = vmatprep.mubr.bf16.mxu0 0
    %958 = vmatmul.mubr.bf16.gmra.mrb[0].mxu0 %v225
    %v959 = vpop.f32.mrb[0].mxu0
    %v960 = vadd.f32 0.0, %v959
    %v961 = vpop.f32.mrb[0].mxu0
    %v962 = vpop.f32.mrb[0].mxu0
    %v963 = vadd.f32 0.0, %v962
    %v964 = vpop.f32.mrb[0].mxu0
    %965 = vmatprep.mubr.bf16.mxu0 0
    %966 = vmatmul.mubr.bf16.gmra.mrb[0].mxu0 %v226
    %v967 = vpop.f32.mrb[0].mxu0
    %v968 = vadd.f32 0.0, %v967
    %v969 = vpop.f32.mrb[0].mxu0
    %v970 = vpop.f32.mrb[0].mxu0
    %v971 = vadd.f32 0.0, %v970
    %v972 = vpop.f32.mrb[0].mxu0
    %973 = vdwg.mxu0
    %v974 = vpack.c.bf16 %v915, %v912
    %v975 = vpack.c.bf16 %v923, %v920
    %v976 = vpack.c.bf16 %v931, %v928
    %v977 = vpack.c.bf16 %v939, %v936
    %v978 = vpack.c.bf16 %v947, %v944
    %v979 = vpack.c.bf16 %v955, %v952
    %v980 = vpack.c.bf16 %v963, %v960
    %v981 = vpack.c.bf16 %v971, %v968
    %v982 = vld [vmem:[#allocation11] sm:$0xf]
    %v983 = vld [vmem:[#allocation11 + $0x4] sm:$0xf]
    %v984 = vld [vmem:[#allocation11 + $0x8] sm:$0xf]
    %v985 = vld [vmem:[#allocation11 + $0xc] sm:$0xf]
    %v986 = vld [vmem:[#allocation11 + $0x10] sm:$0xf]
    %v987 = vld [vmem:[#allocation11 + $0x14] sm:$0xf]
    %v988 = vld [vmem:[#allocation11 + $0x18] sm:$0xf]
    %v989 = vld [vmem:[#allocation11 + $0x1c] sm:$0xf]
    %v990 = vld [vmem:[#allocation11 + $0x20] sm:$0xf]
    %v991 = vld [vmem:[#allocation11 + $0x24] sm:$0xf]
    %v992 = vld [vmem:[#allocation11 + $0x28] sm:$0xf]
    %v993 = vld [vmem:[#allocation11 + $0x2c] sm:$0xf]
    %v994 = vld [vmem:[#allocation11 + $0x30] sm:$0xf]
    %v995 = vld [vmem:[#allocation11 + $0x34] sm:$0xf]
    %v996 = vld [vmem:[#allocation11 + $0x38] sm:$0xf]
    %v997 = vld [vmem:[#allocation11 + $0x3c] sm:$0xf]
    %v998 = vld [vmem:[%s8] sm:$0x1]
    %v1000 = vlaneseq
    %v1001 = vshrl.u32 %v1000, 7
    %v1002 = vsub.s32 0, %v1001
    %v1003 = vrot.slane %v998, %v1002
    %v1021 = vunpack.c.l.b16 %v982
    %v1022 = vunpack.c.l.b16 %v983
    %v1023 = vunpack.c.l.b16 %v984
    %v1024 = vunpack.c.l.b16 %v985
    %v1025 = vunpack.c.l.b16 %v986
    %v1026 = vunpack.c.l.b16 %v987
    %v1027 = vunpack.c.l.b16 %v988
    %v1028 = vunpack.c.l.b16 %v989
    %v1029 = vunpack.c.l.b16 %v990
    %v1030 = vunpack.c.l.b16 %v991
    %v1031 = vunpack.c.l.b16 %v992
    %v1032 = vunpack.c.l.b16 %v993
    %v1033 = vunpack.c.l.b16 %v994
    %v1034 = vunpack.c.l.b16 %v995
    %v1035 = vunpack.c.l.b16 %v996
    %v1036 = vunpack.c.l.b16 %v997
    %v1037 = vpack.c.b16 %v1022, %v1021
    %v1038 = vpack.c.b16 %v1024, %v1023
    %v1039 = vpack.c.b16 %v1026, %v1025
    %v1040 = vpack.c.b16 %v1028, %v1027
    %v1041 = vpack.c.b16 %v1030, %v1029
    %v1042 = vpack.c.b16 %v1032, %v1031
    %v1043 = vpack.c.b16 %v1034, %v1033
    %v1044 = vpack.c.b16 %v1036, %v1035
    %1053 = vmatprep.subr.bf16.mxu0 0
    %1054 = vmatpush1.bf16.msra.mxu0 %v1037
    %1055 = vmatprep.subr.bf16.mxu0 0
    %1056 = vmatpush1.bf16.msra.mxu0 %v1038
    %1057 = vmatprep.subr.bf16.mxu0 0
    %1058 = vmatpush1.bf16.msra.mxu0 %v1039
    %1059 = vmatprep.subr.bf16.mxu0 0
    %1060 = vmatpush1.bf16.msra.mxu0 %v1040
    %1061 = vmatprep.subr.bf16.mxu0 0
    %1062 = vmatpush1.bf16.msra.mxu0 %v1041
    %1063 = vmatprep.subr.bf16.mxu0 0
    %1064 = vmatpush1.bf16.msra.mxu0 %v1042
    %1065 = vmatprep.subr.bf16.mxu0 0
    %1066 = vmatpush1.bf16.msra.mxu0 %v1043
    %1067 = vmatprep.subr.bf16.mxu0 0
    %1068 = vmatpush1.bf16.msra.mxu0 %v1044
    %1069 = vmatprep.subr.bf16.mxu0 0
    %1070 = vmatpush1.bf16.msra.mxu0 0
    %1071 = vmatprep.subr.bf16.mxu0 0
    %1072 = vmatpush1.bf16.msra.mxu0 0
    %1073 = vmatprep.subr.bf16.mxu0 0
    %1074 = vmatpush1.bf16.msra.mxu0 0
    %1075 = vmatprep.subr.bf16.mxu0 0
    %1076 = vmatpush1.bf16.msra.mxu0 0
    %1077 = vmatprep.subr.bf16.mxu0 0
    %1078 = vmatpush1.bf16.msra.mxu0 0
    %1079 = vmatprep.subr.bf16.mxu0 0
    %1080 = vmatpush1.bf16.msra.mxu0 0
    %1081 = vmatprep.subr.bf16.mxu0 0
    %1082 = vmatpush1.bf16.msra.mxu0 0
    %1083 = vmatprep.subr.bf16.mxu0 0
    %1084 = vmatpush1.bf16.msra.mxu0 0
    %1085 = vmatprep.mubr.bf16.mxu0 0
    %1086 = vmatmul.mubr.bf16.gmra.mrb[0].mxu0 %v974
    %v1087 = vpop.f32.mrb[0].mxu0
    %v1088 = vadd.f32 %v1003, %v1087
    %v1089 = vpop.f32.mrb[0].mxu0
    %v1090 = vpop.f32.mrb[0].mxu0
    %v1091 = vadd.f32 %v1003, %v1090
    %v1092 = vpop.f32.mrb[0].mxu0
    %1093 = vmatprep.mubr.bf16.mxu0 0
    %1094 = vmatmul.mubr.bf16.gmra.mrb[0].mxu0 %v975
    %v1095 = vpop.f32.mrb[0].mxu0
    %v1096 = vadd.f32 %v1003, %v1095
    %v1097 = vpop.f32.mrb[0].mxu0
    %v1098 = vpop.f32.mrb[0].mxu0
    %v1099 = vadd.f32 %v1003, %v1098
    %v1100 = vpop.f32.mrb[0].mxu0
    %1101 = vmatprep.mubr.bf16.mxu0 0
    %1102 = vmatmul.mubr.bf16.gmra.mrb[0].mxu0 %v976
    %v1103 = vpop.f32.mrb[0].mxu0
    %v1104 = vadd.f32 %v1003, %v1103
    %v1105 = vpop.f32.mrb[0].mxu0
    %v1106 = vpop.f32.mrb[0].mxu0
    %v1107 = vadd.f32 %v1003, %v1106
    %v1108 = vpop.f32.mrb[0].mxu0
    %1109 = vmatprep.mubr.bf16.mxu0 0
    %1110 = vmatmul.mubr.bf16.gmra.mrb[0].mxu0 %v977
    %v1111 = vpop.f32.mrb[0].mxu0
    %v1112 = vadd.f32 %v1003, %v1111
    %v1113 = vpop.f32.mrb[0].mxu0
    %v1114 = vpop.f32.mrb[0].mxu0
    %v1115 = vadd.f32 %v1003, %v1114
    %v1116 = vpop.f32.mrb[0].mxu0
    %1117 = vmatprep.mubr.bf16.mxu0 0
    %1118 = vmatmul.mubr.bf16.gmra.mrb[0].mxu0 %v978
    %v1119 = vpop.f32.mrb[0].mxu0
    %v1120 = vadd.f32 %v1003, %v1119
    %v1121 = vpop.f32.mrb[0].mxu0
    %v1122 = vpop.f32.mrb[0].mxu0
    %v1123 = vadd.f32 %v1003, %v1122
    %v1124 = vpop.f32.mrb[0].mxu0
    %1125 = vmatprep.mubr.bf16.mxu0 0
    %1126 = vmatmul.mubr.bf16.gmra.mrb[0].mxu0 %v979
    %v1127 = vpop.f32.mrb[0].mxu0
    %v1128 = vadd.f32 %v1003, %v1127
    %v1129 = vpop.f32.mrb[0].mxu0
    %v1130 = vpop.f32.mrb[0].mxu0
    %v1131 = vadd.f32 %v1003, %v1130
    %v1132 = vpop.f32.mrb[0].mxu0
    %1133 = vmatprep.mubr.bf16.mxu0 0
    %1134 = vmatmul.mubr.bf16.gmra.mrb[0].mxu0 %v980
    %v1135 = vpop.f32.mrb[0].mxu0
    %v1136 = vadd.f32 %v1003, %v1135
    %v1137 = vpop.f32.mrb[0].mxu0
    %v1138 = vpop.f32.mrb[0].mxu0
    %v1139 = vadd.f32 %v1003, %v1138
    %v1140 = vpop.f32.mrb[0].mxu0
    %1141 = vmatprep.mubr.bf16.mxu0 0
    %1142 = vmatmul.mubr.bf16.gmra.mrb[0].mxu0 %v981
    %v1143 = vpop.f32.mrb[0].mxu0
    %v1144 = vadd.f32 %v1003, %v1143
    %v1145 = vpop.f32.mrb[0].mxu0
    %v1146 = vpop.f32.mrb[0].mxu0
    %v1147 = vadd.f32 %v1003, %v1146
    %v1148 = vpop.f32.mrb[0].mxu0
    %1149 = vdwg.mxu0
    %v1150 = vmax.f32 %v1088, 0.0
    %v1151 = vmax.f32 %v1091, 0.0
    %v1152 = vmax.f32 %v1096, 0.0
    %v1153 = vmax.f32 %v1099, 0.0
    %v1154 = vmax.f32 %v1104, 0.0
    %v1155 = vmax.f32 %v1107, 0.0
    %v1156 = vmax.f32 %v1112, 0.0
    %v1157 = vmax.f32 %v1115, 0.0
    %v1158 = vmax.f32 %v1120, 0.0
    %v1159 = vmax.f32 %v1123, 0.0
    %v1160 = vmax.f32 %v1128, 0.0
    %v1161 = vmax.f32 %v1131, 0.0
    %v1162 = vmax.f32 %v1136, 0.0
    %v1163 = vmax.f32 %v1139, 0.0
    %v1164 = vmax.f32 %v1144, 0.0
    %v1165 = vmax.f32 %v1147, 0.0
    %v1166 = vpack.c.bf16 %v1151, %v1150
    %v1167 = vpack.c.bf16 %v1153, %v1152
    %v1168 = vpack.c.bf16 %v1155, %v1154
    %v1169 = vpack.c.bf16 %v1157, %v1156
    %v1170 = vpack.c.bf16 %v1159, %v1158
    %v1171 = vpack.c.bf16 %v1161, %v1160
    %v1172 = vpack.c.bf16 %v1163, %v1162
    %v1173 = vpack.c.bf16 %v1165, %v1164
    %v1174 = vld [vmem:[#allocation7] sm:$0xf]
    %v1175 = vld [vmem:[#allocation7 + $0x4] sm:$0xf]
    %v1178 = vunpack.c.l.b16 %v1174
    %v1179 = vunpack.c.l.b16 %v1175
    %v1180 = vpack.c.b16 %v1179, %v1178
    %1182 = vmatprep.subr.bf16.mxu0 0
    %1183 = vmatpush1.bf16.msra.mxu0 %v1166
    %1184 = vmatprep.subr.bf16.mxu0 0
    %1185 = vmatpush1.bf16.msra.mxu0 %v1167
    %1186 = vmatprep.subr.bf16.mxu0 0
    %1187 = vmatpush1.bf16.msra.mxu0 %v1168
    %1188 = vmatprep.subr.bf16.mxu0 0
    %1189 = vmatpush1.bf16.msra.mxu0 %v1169
    %1190 = vmatprep.subr.bf16.mxu0 0
    %1191 = vmatpush1.bf16.msra.mxu0 %v1170
    %1192 = vmatprep.subr.bf16.mxu0 0
    %1193 = vmatpush1.bf16.msra.mxu0 %v1171
    %1194 = vmatprep.subr.bf16.mxu0 0
    %1195 = vmatpush1.bf16.msra.mxu0 %v1172
    %1196 = vmatprep.subr.bf16.mxu0 0
    %1197 = vmatpush1.bf16.msra.mxu0 %v1173
    %1198 = vmatprep.subr.bf16.mxu0 0
    %1199 = vmatpush1.bf16.msra.mxu0 0
    %1200 = vmatprep.subr.bf16.mxu0 0
    %1201 = vmatpush1.bf16.msra.mxu0 0
    %1202 = vmatprep.subr.bf16.mxu0 0
    %1203 = vmatpush1.bf16.msra.mxu0 0
    %1204 = vmatprep.subr.bf16.mxu0 0
    %1205 = vmatpush1.bf16.msra.mxu0 0
    %1206 = vmatprep.subr.bf16.mxu0 0
    %1207 = vmatpush1.bf16.msra.mxu0 0
    %1208 = vmatprep.subr.bf16.mxu0 0
    %1209 = vmatpush1.bf16.msra.mxu0 0
    %1210 = vmatprep.subr.bf16.mxu0 0
    %1211 = vmatpush1.bf16.msra.mxu0 0
    %1212 = vmatprep.subr.bf16.mxu0 0
    %1213 = vmatpush1.bf16.msra.mxu0 0
    %1214 = vmatprep.mubr.bf16.mxu0 0
    %1215 = vmatmul.mubr.bf16.gmra.mrb[0].mxu0 %v1180
    %v1216 = vpop.f32.mrb[0].mxu0
    %v1217 = vadd.f32 0.0, %v1216
    %v1218 = vpop.f32.mrb[0].mxu0
    %v1219 = vpop.f32.mrb[0].mxu0
    %v1220 = vadd.f32 0.0, %v1219
    %v1221 = vpop.f32.mrb[0].mxu0
    %1222 = vdwg.mxu0
    %v1223 = vpack.c.bf16 %v1220, %v1217
    %v1224 = vld [vmem:[#allocation13] sm:$0xf]
    %v1225 = vld [vmem:[#allocation13 + $0x4] sm:$0xf]
    %v1226 = vld [vmem:[#allocation13 + $0x8] sm:$0xf]
    %v1227 = vld [vmem:[#allocation13 + $0xc] sm:$0xf]
    %v1228 = vld [vmem:[#allocation13 + $0x10] sm:$0xf]
    %v1229 = vld [vmem:[#allocation13 + $0x14] sm:$0xf]
    %v1230 = vld [vmem:[#allocation13 + $0x18] sm:$0xf]
    %v1231 = vld [vmem:[#allocation13 + $0x1c] sm:$0xf]
    %v1232 = vld [vmem:[#allocation13 + $0x20] sm:$0xf]
    %v1233 = vld [vmem:[#allocation13 + $0x24] sm:$0xf]
    %v1234 = vld [vmem:[#allocation13 + $0x28] sm:$0xf]
    %v1235 = vld [vmem:[#allocation13 + $0x2c] sm:$0xf]
    %v1236 = vld [vmem:[#allocation13 + $0x30] sm:$0xf]
    %v1237 = vld [vmem:[#allocation13 + $0x34] sm:$0xf]
    %v1238 = vld [vmem:[#allocation13 + $0x38] sm:$0xf]
    %v1239 = vld [vmem:[#allocation13 + $0x3c] sm:$0xf]
    %v1240 = vld [vmem:[%s10] sm:$0x1]
    %v1242 = vlaneseq
    %v1243 = vshrl.u32 %v1242, 7
    %v1244 = vsub.s32 0, %v1243
    %v1245 = vrot.slane %v1240, %v1244
    %v1263 = vunpack.c.l.b16 %v1224
    %v1264 = vunpack.c.l.b16 %v1225
    %v1265 = vunpack.c.l.b16 %v1226
    %v1266 = vunpack.c.l.b16 %v1227
    %v1267 = vunpack.c.l.b16 %v1228
    %v1268 = vunpack.c.l.b16 %v1229
    %v1269 = vunpack.c.l.b16 %v1230
    %v1270 = vunpack.c.l.b16 %v1231
    %v1271 = vunpack.c.l.b16 %v1232
    %v1272 = vunpack.c.l.b16 %v1233
    %v1273 = vunpack.c.l.b16 %v1234
    %v1274 = vunpack.c.l.b16 %v1235
    %v1275 = vunpack.c.l.b16 %v1236
    %v1276 = vunpack.c.l.b16 %v1237
    %v1277 = vunpack.c.l.b16 %v1238
    %v1278 = vunpack.c.l.b16 %v1239
    %v1279 = vpack.c.b16 %v1264, %v1263
    %v1280 = vpack.c.b16 %v1266, %v1265
    %v1281 = vpack.c.b16 %v1268, %v1267
    %v1282 = vpack.c.b16 %v1270, %v1269
    %v1283 = vpack.c.b16 %v1272, %v1271
    %v1284 = vpack.c.b16 %v1274, %v1273
    %v1285 = vpack.c.b16 %v1276, %v1275
    %v1286 = vpack.c.b16 %v1278, %v1277
    %1295 = vmatprep.subr.bf16.mxu0 0
    %1296 = vmatpush1.bf16.msra.mxu0 %v1279
    %1297 = vmatprep.subr.bf16.mxu0 0
    %1298 = vmatpush1.bf16.msra.mxu0 %v1280
    %1299 = vmatprep.subr.bf16.mxu0 0
    %1300 = vmatpush1.bf16.msra.mxu0 %v1281
    %1301 = vmatprep.subr.bf16.mxu0 0
    %1302 = vmatpush1.bf16.msra.mxu0 %v1282
    %1303 = vmatprep.subr.bf16.mxu0 0
    %1304 = vmatpush1.bf16.msra.mxu0 %v1283
    %1305 = vmatprep.subr.bf16.mxu0 0
    %1306 = vmatpush1.bf16.msra.mxu0 %v1284
    %1307 = vmatprep.subr.bf16.mxu0 0
    %1308 = vmatpush1.bf16.msra.mxu0 %v1285
    %1309 = vmatprep.subr.bf16.mxu0 0
    %1310 = vmatpush1.bf16.msra.mxu0 %v1286
    %1311 = vmatprep.subr.bf16.mxu0 0
    %1312 = vmatpush1.bf16.msra.mxu0 0
    %1313 = vmatprep.subr.bf16.mxu0 0
    %1314 = vmatpush1.bf16.msra.mxu0 0
    %1315 = vmatprep.subr.bf16.mxu0 0
    %1316 = vmatpush1.bf16.msra.mxu0 0
    %1317 = vmatprep.subr.bf16.mxu0 0
    %1318 = vmatpush1.bf16.msra.mxu0 0
    %1319 = vmatprep.subr.bf16.mxu0 0
    %1320 = vmatpush1.bf16.msra.mxu0 0
    %1321 = vmatprep.subr.bf16.mxu0 0
    %1322 = vmatpush1.bf16.msra.mxu0 0
    %1323 = vmatprep.subr.bf16.mxu0 0
    %1324 = vmatpush1.bf16.msra.mxu0 0
    %1325 = vmatprep.subr.bf16.mxu0 0
    %1326 = vmatpush1.bf16.msra.mxu0 0
    %1327 = vmatprep.mubr.bf16.mxu0 0
    %1328 = vmatmul.mubr.bf16.gmra.mrb[0].mxu0 %v1223
    %v1329 = vpop.f32.mrb[0].mxu0
    %v1330 = vadd.f32 %v1245, %v1329
    %v1331 = vpop.f32.mrb[0].mxu0
    %v1332 = vpop.f32.mrb[0].mxu0
    %v1333 = vadd.f32 %v1245, %v1332
    %v1334 = vpop.f32.mrb[0].mxu0
    %1335 = vdwg.mxu0
    %v1336 = vmax.f32 %v1330, 0.0
    %v1337 = vmax.f32 %v1333, 0.0
    %v1338 = vpack.c.bf16 %v1337, %v1336
    %v1339 = vld [vmem:[#allocation14] sm:$0xf]
    %v1340 = vld [vmem:[#allocation14 + $0x4] sm:$0xf]
    %v1341 = vld [vmem:[#allocation14 + $0x8] sm:$0xf]
    %v1342 = vld [vmem:[#allocation14 + $0xc] sm:$0xf]
    %v1343 = vld [vmem:[#allocation14 + $0x10] sm:$0xf]
    %v1344 = vld [vmem:[#allocation14 + $0x14] sm:$0xf]
    %v1345 = vld [vmem:[#allocation14 + $0x18] sm:$0xf]
    %v1346 = vld [vmem:[#allocation14 + $0x1c] sm:$0xf]
    %v1347 = vld [vmem:[#allocation14 + $0x20] sm:$0xf]
    %v1348 = vld [vmem:[#allocation14 + $0x24] sm:$0xf]
    %v1349 = vld [vmem:[#allocation14 + $0x28] sm:$0xf]
    %v1350 = vld [vmem:[#allocation14 + $0x2c] sm:$0xf]
    %v1351 = vld [vmem:[#allocation14 + $0x30] sm:$0xf]
    %v1352 = vld [vmem:[#allocation14 + $0x34] sm:$0xf]
    %v1353 = vld [vmem:[#allocation14 + $0x38] sm:$0xf]
    %v1354 = vld [vmem:[#allocation14 + $0x3c] sm:$0xf]
    %v1355 = vld [vmem:[%s12] sm:$0x1]
    %v1357 = vlaneseq
    %v1358 = vshrl.u32 %v1357, 7
    %v1359 = vsub.s32 0, %v1358
    %v1360 = vrot.slane %v1355, %v1359
    %v1378 = vunpack.c.l.b16 %v1339
    %v1379 = vunpack.c.l.b16 %v1340
    %v1380 = vunpack.c.l.b16 %v1341
    %v1381 = vunpack.c.l.b16 %v1342
    %v1382 = vunpack.c.l.b16 %v1343
    %v1383 = vunpack.c.l.b16 %v1344
    %v1384 = vunpack.c.l.b16 %v1345
    %v1385 = vunpack.c.l.b16 %v1346
    %v1386 = vunpack.c.l.b16 %v1347
    %v1387 = vunpack.c.l.b16 %v1348
    %v1388 = vunpack.c.l.b16 %v1349
    %v1389 = vunpack.c.l.b16 %v1350
    %v1390 = vunpack.c.l.b16 %v1351
    %v1391 = vunpack.c.l.b16 %v1352
    %v1392 = vunpack.c.l.b16 %v1353
    %v1393 = vunpack.c.l.b16 %v1354
    %v1394 = vpack.c.b16 %v1379, %v1378
    %v1395 = vpack.c.b16 %v1381, %v1380
    %v1396 = vpack.c.b16 %v1383, %v1382
    %v1397 = vpack.c.b16 %v1385, %v1384
    %v1398 = vpack.c.b16 %v1387, %v1386
    %v1399 = vpack.c.b16 %v1389, %v1388
    %v1400 = vpack.c.b16 %v1391, %v1390
    %v1401 = vpack.c.b16 %v1393, %v1392
    %1410 = vmatprep.subr.bf16.mxu0 0
    %1411 = vmatpush1.bf16.msra.mxu0 %v1394
    %1412 = vmatprep.subr.bf16.mxu0 0
    %1413 = vmatpush1.bf16.msra.mxu0 %v1395
    %1414 = vmatprep.subr.bf16.mxu0 0
    %1415 = vmatpush1.bf16.msra.mxu0 %v1396
    %1416 = vmatprep.subr.bf16.mxu0 0
    %1417 = vmatpush1.bf16.msra.mxu0 %v1397
    %1418 = vmatprep.subr.bf16.mxu0 0
    %1419 = vmatpush1.bf16.msra.mxu0 %v1398
    %1420 = vmatprep.subr.bf16.mxu0 0
    %1421 = vmatpush1.bf16.msra.mxu0 %v1399
    %1422 = vmatprep.subr.bf16.mxu0 0
    %1423 = vmatpush1.bf16.msra.mxu0 %v1400
    %1424 = vmatprep.subr.bf16.mxu0 0
    %1425 = vmatpush1.bf16.msra.mxu0 %v1401
    %1426 = vmatprep.subr.bf16.mxu0 0
    %1427 = vmatpush1.bf16.msra.mxu0 0
    %1428 = vmatprep.subr.bf16.mxu0 0
    %1429 = vmatpush1.bf16.msra.mxu0 0
    %1430 = vmatprep.subr.bf16.mxu0 0
    %1431 = vmatpush1.bf16.msra.mxu0 0
    %1432 = vmatprep.subr.bf16.mxu0 0
    %1433 = vmatpush1.bf16.msra.mxu0 0
    %1434 = vmatprep.subr.bf16.mxu0 0
    %1435 = vmatpush1.bf16.msra.mxu0 0
    %1436 = vmatprep.subr.bf16.mxu0 0
    %1437 = vmatpush1.bf16.msra.mxu0 0
    %1438 = vmatprep.subr.bf16.mxu0 0
    %1439 = vmatpush1.bf16.msra.mxu0 0
    %1440 = vmatprep.subr.bf16.mxu0 0
    %1441 = vmatpush1.bf16.msra.mxu0 0
    %1442 = vmatprep.mubr.bf16.mxu0 0
    %1443 = vmatmul.mubr.bf16.gmra.mrb[0].mxu0 %v1338
    %v1444 = vpop.f32.mrb[0].mxu0
    %v1445 = vadd.f32 %v1360, %v1444
    %v1446 = vpop.f32.mrb[0].mxu0
    %v1447 = vpop.f32.mrb[0].mxu0
    %v1448 = vadd.f32 %v1360, %v1447
    %v1449 = vpop.f32.mrb[0].mxu0
    %1450 = vdwg.mxu0
    %1451 = vst [vmem:[#allocation16] sm:$0xff] %v1445
    %1452 = vst [vmem:[#allocation16 + $0x8] sm:$0xff] %v1448
    // Predicated region
    $region86: #{tpu_custom_call.1} parent=1 // pred_check
      _
    $region87: #{tpu_custom_call.1} parent=1 // pred_check_branch
      %1454 = sbr.rel (0) target = $region89
    $region88: #{tpu_custom_call.1} parent=1 // pred_region
      %s1456 = ssub.s32 256, 256
      %1457 = vsyncadd [#allocation4], %s1456
      %s1458 = sshll.u32 [#allocation16], 4
      %s1459 = int_to_ptr.vmem [resolvable:$true] %s1458
      %1464 = dma.vmem_to_hbm [thread:$0]  %s1459, 256, %s13, [#allocation4], 128, 128, 8
    $region89: #{tpu_custom_call.1} parent=1 // pred_fallthru
      _
    // Predicated region
    $region90: #{tpu_custom_call.1} parent=1 // pred_check
      _
    $region91: #{tpu_custom_call.1} parent=1 // pred_check_branch
      %1466 = sbr.rel (0) target = $region93
    $region92: #{tpu_custom_call.1} parent=1 // pred_region
      %1467 = dma.done [#allocation4], 256
    $region93: #{tpu_custom_call.1} parent=1 // pred_fallthru
      _
    %1468 = vsyncpa [#allocation3], 1
    %1469 = vsyncpa [#allocation6], 1
    %1470 = vsyncpa [#allocation9], 1
    %1471 = vsyncpa [#allocation12], 1
    %1472 = vsyncpa [#allocation15], 1
    %1473 = vsyncpa [#allocation4], 1

</llo_original>
